<compile_context>
chip_gen: v6e
topology: v6e:2x2x1
jax: 0.10.0
libtpu: 0.0.40
codegen_flags: <defaults>
</compile_context>

<pallas_src>
import functools

import jax
import jax.numpy as jnp
import numpy as np
from jax import lax
from jax.experimental import pallas as pl
from jax.experimental.pallas import tpu as pltpu

THRESH = 1.0      # LIFSpike defaults in ImageNet_snn.py
TAU = 0.5
BN_EPS = 1e-5

LANE = 128
VMEM_LIMIT = 48 * 1024 * 1024   # explicit; fits v7x's 64 MiB VMEM with headroom


def _round_up(x, m):
    return (x + m - 1) // m * m


def _pick_row_tile(rows, t_steps, cpad, budget_bytes=VMEM_LIMIT // 2):
    """Largest divisor of `rows` that is a multiple of 8 and fits the VMEM budget.

    Per row of a (T, tr, Cpad) block: bf16 input + bf16 output, each
    double-buffered, plus ~4 fp32 (tr, Cpad) temporaries live in the kernel body.
    """
    per_row = t_steps * cpad * 2 * 2 * 2 + 4 * cpad * 4
    cap = max(8, budget_bytes // per_row)
    for cand in range(min(rows, cap), 7, -1):
        if rows % cand == 0 and cand % 8 == 0:
            return cand
    # TODO(synk): ragged row counts need pl.cdiv + masked tails; fall back to a
    # single full-extent block (always legal) for odd toy shapes.
    return rows


# ---------------- Pallas kernels ----------------

def conv_stats_kernel(x_ref, w_ref, y_ref, stats_ref, *, H, W, k_pad):
    """One (b, t) tile of the 3x3x3 conv + packed per-tile BN partial sums.

    x_ref     : (T+2, H+2, W+2, Cin) padded channels-last slab of one batch elem
    w_ref     : (Kpad, Cpad) bf16 weight matrix, rows ordered (kt, kh, kw, ci)
    y_ref     : (H*W, Cpad)  bf16 conv activation tile, rows ordered (h, w)
    stats_ref : (2, Cpad) fp32 per-tile [sum; sum-of-squares]
    """
    t = pl.program_id(1)
    cols = []
    for kt in range(3):
        plane = x_ref[t + kt]                               # (H+2, W+2, Cin) f32
        for kh in range(3):
            for kw in range(3):
                cols.append(plane[kh:kh + H, kw:kw + W, :])  # (H, W, Cin)
    if k_pad:
        cols.append(jnp.zeros((H, W, k_pad), cols[0].dtype))
    x_col = jnp.concatenate(cols, axis=-1)                  # (H, W, Kpad) f32
    x_col = x_col.reshape(H * W, x_col.shape[-1]).astype(jnp.bfloat16)

    acc = jnp.dot(x_col, w_ref[...], preferred_element_type=jnp.float32)
    y_ref[...] = acc.astype(y_ref.dtype)
    stats_ref[...] = jnp.concatenate(
        [jnp.sum(acc, axis=0, keepdims=True),
         jnp.sum(acc * acc, axis=0, keepdims=True)], axis=0)


def bn_lif_kernel(y_ref, scale_ref, shift_ref, o_ref):
    """Folded BatchNorm affine + LIF temporal recurrence over the leading T axis."""
    rows, cpad = y_ref.shape[1], y_ref.shape[2]
    scale = jnp.broadcast_to(scale_ref[...], (rows, cpad))   # hoisted once
    shift = jnp.broadcast_to(shift_ref[...], (rows, cpad))
    mem = jnp.zeros((rows, cpad), jnp.float32)
    for t in range(y_ref.shape[0]):                          # T small & static
        x_t = y_ref[t].astype(jnp.float32) * scale + shift
        mem = mem * TAU + x_t
        spike = (mem > THRESH).astype(jnp.float32)           # ZIF fwd: (u-th>0)
        mem = (1.0 - spike) * mem
        o_ref[t] = spike.astype(o_ref.dtype)


# ---------------- wrapper ----------------

def conv3d_snn_forward(x, weight, gamma, beta):
    T, B, Cin, H, W = x.shape
    Cout = weight.shape[0]
    HW = H * W
    K = 27 * Cin
    Cpad = _round_up(Cout, LANE)
    Kpad = _round_up(K, LANE)
    Tp, Hp, Wp = T + 2, H + 2, W + 2

    # permute(1,2,0,3,4) equivalent, kept channels-last for the kernel:
    # [T,B,Cin,H,W] -> [B,T,H,W,Cin]; zero-pad T/H/W by 1 on each side.
    xc = jnp.transpose(x, (1, 0, 3, 4, 2))
    xp = jnp.pad(xc, ((0, 0), (1, 1), (1, 1), (1, 1), (0, 0))).astype(jnp.float32)

    # (Cout,Cin,3,3,3) -> (3,3,3,Cin,Cout) -> (K, Cout) -> zero-pad -> bf16.
    w_mat = jnp.transpose(weight, (2, 3, 4, 1, 0)).reshape(K, Cout)
    w_mat = jnp.pad(w_mat, ((0, Kpad - K), (0, Cpad - Cout))).astype(jnp.bfloat16)

    kern = functools.partial(conv_stats_kernel, H=H, W=W, k_pad=Kpad - K)
    y, stats = pl.pallas_call(
        kern,
        out_shape=(jax.ShapeDtypeStruct((T, B, HW, Cpad), jnp.bfloat16),
                   jax.ShapeDtypeStruct((B, T, 2, Cpad), jnp.float32)),
        grid_spec=pltpu.PrefetchScalarGridSpec(
            num_scalar_prefetch=0,
            grid=(B, T),        # t innermost: per-b input slab re-used across T
            in_specs=[
                pl.BlockSpec((None, Tp, Hp, Wp, Cin),
                             lambda b, t: (b, 0, 0, 0, 0)),
                pl.BlockSpec((Kpad, Cpad), lambda b, t: (0, 0)),
            ],
            out_specs=[
                pl.BlockSpec((None, None, HW, Cpad), lambda b, t: (t, b, 0, 0)),
                pl.BlockSpec((None, None, 2, Cpad), lambda b, t: (b, t, 0, 0)),
            ]),
        compiler_params=pltpu.CompilerParams(
            dimension_semantics=("parallel", "parallel"),
            vmem_limit_bytes=VMEM_LIMIT),
    )(xp, w_mat)

    # BatchNorm3d (training mode): batch stats over (B, T, H, W) per channel,
    # biased variance, folded into one scale/shift pair (computed in f32, XLA).
    M = B * T * HW
    csum = jnp.sum(stats[:, :, 0, :], axis=(0, 1))           # (Cpad,)
    csq = jnp.sum(stats[:, :, 1, :], axis=(0, 1))
    mean = csum / M
    var = jnp.maximum(csq / M - mean * mean, 0.0)
    gamma_p = jnp.pad(gamma.astype(jnp.float32), (0, Cpad - Cout))
    beta_p = jnp.pad(beta.astype(jnp.float32), (0, Cpad - Cout))
    scale = gamma_p / jnp.sqrt(var + BN_EPS)
    shift = beta_p - mean * scale

    R = B * HW
    y2 = y.reshape(T, R, Cpad)                      # free (contiguous) reshape
    tr = _pick_row_tile(R, T, Cpad)

    spikes = pl.pallas_call(
        bn_lif_kernel,
        out_shape=jax.ShapeDtypeStruct((T, R, Cpad), jnp.bfloat16),
        grid_spec=pltpu.PrefetchScalarGridSpec(
            num_scalar_prefetch=0,
            grid=(R // tr,),
            in_specs=[pl.BlockSpec((T, tr, Cpad), lambda r: (0, r, 0)),
                      pl.BlockSpec((1, Cpad), lambda r: (0, 0)),
                      pl.BlockSpec((1, Cpad), lambda r: (0, 0))],
            out_specs=pl.BlockSpec((T, tr, Cpad), lambda r: (0, r, 0))),
        compiler_params=pltpu.CompilerParams(
            dimension_semantics=("parallel",),
            vmem_limit_bytes=VMEM_LIMIT),
    )(y2, scale.reshape(1, Cpad), shift.reshape(1, Cpad))

    # TODO(synk): final channel-slice + NCHW permute stay in XLA (layout-only).
    out = spikes.reshape(T, B, H, W, Cpad)[..., :Cout]
    out = jnp.transpose(out, (0, 1, 4, 2, 3))       # [T, B, Cout, H, W]
    return out, y                                   # y returned for testing only


# ---------------- pure-JAX reference (matches kernel numerics: bf16 operands,
# bf16 HBM activation, f32 BN/LIF math) ----------------

def reference_forward(x, weight, gamma, beta):
    T = x.shape[0]
    xb = x.astype(jnp.bfloat16).astype(jnp.float32)
    wb = weight.astype(jnp.bfloat16).astype(jnp.float32)
    xc = jnp.transpose(xb, (1, 2, 0, 3, 4))                 # [B,Cin,T,H,W]
    conv = lax.conv_general_dilated(
        xc, wb, window_strides=(1, 1, 1), padding=((1, 1),) * 3,
        dimension_numbers=('NCDHW', 'OIDHW', 'NCDHW'))
    mean = conv.mean(axis=(0, 2, 3, 4), keepdims=True)
    var = ((conv - mean) ** 2).mean(axis=(0, 2, 3, 4), keepdims=True)
    conv_q = conv.astype(jnp.bfloat16).astype(jnp.float32)  # bf16 intermediate
    bn = (gamma[None, :, None, None, None] * (conv_q - mean)
          / jnp.sqrt(var + BN_EPS) + beta[None, :, None, None, None])
    y = jnp.transpose(bn, (2, 0, 1, 3, 4))                  # [T,B,Cout,H,W]
    mem = jnp.zeros_like(y[0])
    outs = []
    for t in range(T):
        mem = mem * TAU + y[t]
        spike = (mem > THRESH).astype(jnp.float32)
        mem = (1.0 - spike) * mem
        outs.append(spike)
    return jnp.stack(outs, axis=0), conv


if __name__ == "__main__":
    T, B, Cin, Cout, H, W = 4, 2, 4, 8, 8, 8

    key = jax.random.PRNGKey(0)
    kx, kw, kg, kb = jax.random.split(key, 4)
    x = jax.random.normal(kx, (T, B, Cin, H, W), dtype=jnp.float32)
    weight = jax.random.normal(kw, (Cout, Cin, 3, 3, 3), dtype=jnp.float32) * 0.15
    gamma = jax.random.uniform(kg, (Cout,), dtype=jnp.float32,
                               minval=0.5, maxval=1.5)
    beta = jax.random.normal(kb, (Cout,), dtype=jnp.float32) * 0.1

    spikes, y_act = jax.jit(conv3d_snn_forward)(x, weight, gamma, beta)
    jax.block_until_ready(spikes)

    spikes_ref, conv_ref = reference_forward(x, weight, gamma, beta)

    # Conv check: bf16 kernel activation vs f32 reference of the same bf16 operands.
    conv_k = np.asarray(y_act.astype(jnp.float32))[..., :Cout]
    conv_k = conv_k.reshape(T, B, H, W, Cout)
    conv_r = np.transpose(np.asarray(conv_ref), (2, 0, 3, 4, 1))   # (T,B,H,W,C)
    np.testing.assert_allclose(conv_k, conv_r, rtol=2e-2, atol=2e-2)

    sk = np.asarray(spikes.astype(jnp.float32))
    sr = np.asarray(spikes_ref)
    assert sk.shape == (T, B, Cout, H, W)
    # Spikes are 0/1; allow a vanishing number of borderline-threshold flips.
    assert float(np.mean(np.abs(sk - sr))) < 1e-2
    print("KERNEL_OK")
</pallas_src>

<mosaic_0001>
module attributes {stable_mosaic.version = 11 : i64} {
  func.func @conv_stats_kernel(%arg0: i32, %arg1: i32, %arg2: memref<1x6x10x10x4xf32, #tpu.memory_space<vmem>>, %arg3: memref<128x128xbf16, #tpu.memory_space<vmem>>, %arg4: memref<1x1x64x128xbf16, #tpu.memory_space<vmem>>, %arg5: memref<1x1x2x128xf32, #tpu.memory_space<vmem>>) attributes {dimension_semantics = [#tpu.dimension_semantics<parallel>, #tpu.dimension_semantics<parallel>], iteration_bounds = array<i64: 2, 4>, scalar_prefetch = 0 : i64, scratch_operands = 0 : i64, tpu.core_type = #tpu.core_type<tc>, window_params = [{transform_indices = @transform_0, window_bounds = array<i64: 1, 6, 10, 10, 4>}, {pipeline_mode = #tpu.pipeline_mode<synchronous>, transform_indices = @transform_1, window_bounds = array<i64: 128, 128>}, {transform_indices = @transform_2, window_bounds = array<i64: 1, 1, 64, 128>}, {transform_indices = @transform_3, window_bounds = array<i64: 1, 1, 2, 128>}]} {
    %c0_i32 = arith.constant 0 : i32
    %0 = arith.addi %arg1, %c0_i32 : i32
    %c0 = arith.constant 0 : index
    %1 = arith.index_cast %0 : i32 to index
    %c0_0 = arith.constant 0 : index
    %c0_1 = arith.constant 0 : index
    %c0_2 = arith.constant 0 : index
    %2 = vector.load %arg2[%c0, %1, %c0_0, %c0_1, %c0_2] : memref<1x6x10x10x4xf32, #tpu.memory_space<vmem>>, vector<1x1x10x10x4xf32>
    %3 = vector.shape_cast %2 : vector<1x1x10x10x4xf32> to vector<10x10x4xf32>
    %4 = vector.extract_strided_slice %3 {offsets = [0, 0, 0], sizes = [8, 8, 4], strides = [1, 1, 1]} : vector<10x10x4xf32> to vector<8x8x4xf32>
    %5 = vector.extract_strided_slice %3 {offsets = [0, 1, 0], sizes = [8, 8, 4], strides = [1, 1, 1]} : vector<10x10x4xf32> to vector<8x8x4xf32>
    %6 = vector.extract_strided_slice %3 {offsets = [0, 2, 0], sizes = [8, 8, 4], strides = [1, 1, 1]} : vector<10x10x4xf32> to vector<8x8x4xf32>
    %7 = vector.extract_strided_slice %3 {offsets = [1, 0, 0], sizes = [8, 8, 4], strides = [1, 1, 1]} : vector<10x10x4xf32> to vector<8x8x4xf32>
    %8 = vector.extract_strided_slice %3 {offsets = [1, 1, 0], sizes = [8, 8, 4], strides = [1, 1, 1]} : vector<10x10x4xf32> to vector<8x8x4xf32>
    %9 = vector.extract_strided_slice %3 {offsets = [1, 2, 0], sizes = [8, 8, 4], strides = [1, 1, 1]} : vector<10x10x4xf32> to vector<8x8x4xf32>
    %10 = vector.extract_strided_slice %3 {offsets = [2, 0, 0], sizes = [8, 8, 4], strides = [1, 1, 1]} : vector<10x10x4xf32> to vector<8x8x4xf32>
    %11 = vector.extract_strided_slice %3 {offsets = [2, 1, 0], sizes = [8, 8, 4], strides = [1, 1, 1]} : vector<10x10x4xf32> to vector<8x8x4xf32>
    %12 = vector.extract_strided_slice %3 {offsets = [2, 2, 0], sizes = [8, 8, 4], strides = [1, 1, 1]} : vector<10x10x4xf32> to vector<8x8x4xf32>
    %c1_i32 = arith.constant 1 : i32
    %13 = arith.addi %arg1, %c1_i32 : i32
    %c0_3 = arith.constant 0 : index
    %14 = arith.index_cast %13 : i32 to index
    %c0_4 = arith.constant 0 : index
    %c0_5 = arith.constant 0 : index
    %c0_6 = arith.constant 0 : index
    %15 = vector.load %arg2[%c0_3, %14, %c0_4, %c0_5, %c0_6] : memref<1x6x10x10x4xf32, #tpu.memory_space<vmem>>, vector<1x1x10x10x4xf32>
    %16 = vector.shape_cast %15 : vector<1x1x10x10x4xf32> to vector<10x10x4xf32>
    %17 = vector.extract_strided_slice %16 {offsets = [0, 0, 0], sizes = [8, 8, 4], strides = [1, 1, 1]} : vector<10x10x4xf32> to vector<8x8x4xf32>
    %18 = vector.extract_strided_slice %16 {offsets = [0, 1, 0], sizes = [8, 8, 4], strides = [1, 1, 1]} : vector<10x10x4xf32> to vector<8x8x4xf32>
    %19 = vector.extract_strided_slice %16 {offsets = [0, 2, 0], sizes = [8, 8, 4], strides = [1, 1, 1]} : vector<10x10x4xf32> to vector<8x8x4xf32>
    %20 = vector.extract_strided_slice %16 {offsets = [1, 0, 0], sizes = [8, 8, 4], strides = [1, 1, 1]} : vector<10x10x4xf32> to vector<8x8x4xf32>
    %21 = vector.extract_strided_slice %16 {offsets = [1, 1, 0], sizes = [8, 8, 4], strides = [1, 1, 1]} : vector<10x10x4xf32> to vector<8x8x4xf32>
    %22 = vector.extract_strided_slice %16 {offsets = [1, 2, 0], sizes = [8, 8, 4], strides = [1, 1, 1]} : vector<10x10x4xf32> to vector<8x8x4xf32>
    %23 = vector.extract_strided_slice %16 {offsets = [2, 0, 0], sizes = [8, 8, 4], strides = [1, 1, 1]} : vector<10x10x4xf32> to vector<8x8x4xf32>
    %24 = vector.extract_strided_slice %16 {offsets = [2, 1, 0], sizes = [8, 8, 4], strides = [1, 1, 1]} : vector<10x10x4xf32> to vector<8x8x4xf32>
    %25 = vector.extract_strided_slice %16 {offsets = [2, 2, 0], sizes = [8, 8, 4], strides = [1, 1, 1]} : vector<10x10x4xf32> to vector<8x8x4xf32>
    %c2_i32 = arith.constant 2 : i32
    %26 = arith.addi %arg1, %c2_i32 : i32
    %c0_7 = arith.constant 0 : index
    %27 = arith.index_cast %26 : i32 to index
    %c0_8 = arith.constant 0 : index
    %c0_9 = arith.constant 0 : index
    %c0_10 = arith.constant 0 : index
    %28 = vector.load %arg2[%c0_7, %27, %c0_8, %c0_9, %c0_10] : memref<1x6x10x10x4xf32, #tpu.memory_space<vmem>>, vector<1x1x10x10x4xf32>
    %29 = vector.shape_cast %28 : vector<1x1x10x10x4xf32> to vector<10x10x4xf32>
    %30 = vector.extract_strided_slice %29 {offsets = [0, 0, 0], sizes = [8, 8, 4], strides = [1, 1, 1]} : vector<10x10x4xf32> to vector<8x8x4xf32>
    %31 = vector.extract_strided_slice %29 {offsets = [0, 1, 0], sizes = [8, 8, 4], strides = [1, 1, 1]} : vector<10x10x4xf32> to vector<8x8x4xf32>
    %32 = vector.extract_strided_slice %29 {offsets = [0, 2, 0], sizes = [8, 8, 4], strides = [1, 1, 1]} : vector<10x10x4xf32> to vector<8x8x4xf32>
    %33 = vector.extract_strided_slice %29 {offsets = [1, 0, 0], sizes = [8, 8, 4], strides = [1, 1, 1]} : vector<10x10x4xf32> to vector<8x8x4xf32>
    %34 = vector.extract_strided_slice %29 {offsets = [1, 1, 0], sizes = [8, 8, 4], strides = [1, 1, 1]} : vector<10x10x4xf32> to vector<8x8x4xf32>
    %35 = vector.extract_strided_slice %29 {offsets = [1, 2, 0], sizes = [8, 8, 4], strides = [1, 1, 1]} : vector<10x10x4xf32> to vector<8x8x4xf32>
    %36 = vector.extract_strided_slice %29 {offsets = [2, 0, 0], sizes = [8, 8, 4], strides = [1, 1, 1]} : vector<10x10x4xf32> to vector<8x8x4xf32>
    %37 = vector.extract_strided_slice %29 {offsets = [2, 1, 0], sizes = [8, 8, 4], strides = [1, 1, 1]} : vector<10x10x4xf32> to vector<8x8x4xf32>
    %38 = vector.extract_strided_slice %29 {offsets = [2, 2, 0], sizes = [8, 8, 4], strides = [1, 1, 1]} : vector<10x10x4xf32> to vector<8x8x4xf32>
    %cst = arith.constant 0.000000e+00 : f32
    %39 = vector.broadcast %cst : f32 to vector<8x8x20xf32>
    %40 = tpu.concatenate %4, %5, %6, %7, %8, %9, %10, %11, %12, %17, %18, %19, %20, %21, %22, %23 in 2 : vector<8x8x4xf32>, vector<8x8x4xf32>, vector<8x8x4xf32>, vector<8x8x4xf32>, vector<8x8x4xf32>, vector<8x8x4xf32>, vector<8x8x4xf32>, vector<8x8x4xf32>, vector<8x8x4xf32>, vector<8x8x4xf32>, vector<8x8x4xf32>, vector<8x8x4xf32>, vector<8x8x4xf32>, vector<8x8x4xf32>, vector<8x8x4xf32>, vector<8x8x4xf32> -> vector<8x8x64xf32>
    %41 = tpu.concatenate %24, %25, %30, %31, %32, %33, %34, %35, %36, %37, %38, %39 in 2 : vector<8x8x4xf32>, vector<8x8x4xf32>, vector<8x8x4xf32>, vector<8x8x4xf32>, vector<8x8x4xf32>, vector<8x8x4xf32>, vector<8x8x4xf32>, vector<8x8x4xf32>, vector<8x8x4xf32>, vector<8x8x4xf32>, vector<8x8x4xf32>, vector<8x8x20xf32> -> vector<8x8x64xf32>
    %42 = tpu.concatenate %40, %41 in 2 : vector<8x8x64xf32>, vector<8x8x64xf32> -> vector<8x8x128xf32>
    %43 = vector.shape_cast %42 : vector<8x8x128xf32> to vector<64x128xf32>
    %44 = arith.truncf %43 : vector<64x128xf32> to vector<64x128xbf16>
    %c0_11 = arith.constant 0 : index
    %c0_12 = arith.constant 0 : index
    %45 = vector.load %arg3[%c0_11, %c0_12] : memref<128x128xbf16, #tpu.memory_space<vmem>>, vector<128x128xbf16>
    %cst_13 = arith.constant dense<0.000000e+00> : vector<64x128xf32>
    %46 = tpu.matmul %44, %45, %cst_13 {dimension_numbers = #tpu.dot_dimension_numbers<[1], [0], [0], [1], [0, 0, 1, 1], [], []>} : vector<64x128xbf16>, vector<128x128xbf16>, vector<64x128xf32> -> vector<64x128xf32>
    %47 = arith.truncf %46 : vector<64x128xf32> to vector<64x128xbf16>
    %c0_14 = arith.constant 0 : index
    %c0_15 = arith.constant 0 : index
    %c0_16 = arith.constant 0 : index
    %c0_17 = arith.constant 0 : index
    %48 = vector.load %arg4[%c0_14, %c0_15, %c0_16, %c0_17] : memref<1x1x64x128xbf16, #tpu.memory_space<vmem>>, vector<1x1x64x128xbf16>
    %49 = vector.shape_cast %48 : vector<1x1x64x128xbf16> to vector<64x128xbf16>
    %50 = vector.shape_cast %47 : vector<64x128xbf16> to vector<1x1x64x128xbf16>
    tpu.vector_store %arg4[%c0_14, %c0_15, %c0_16, %c0_17], %50 {strides = array<i32>} : memref<1x1x64x128xbf16, #tpu.memory_space<vmem>>, vector<1x1x64x128xbf16>,
    %cst_18 = arith.constant dense<0.000000e+00> : vector<128xf32>
    %51 = vector.multi_reduction <add>, %46, %cst_18 [0] : vector<64x128xf32> to vector<128xf32>
    %52 = vector.shape_cast %51 : vector<128xf32> to vector<1x128xf32>
    %53 = arith.mulf %46, %46 : vector<64x128xf32>
    %cst_19 = arith.constant dense<0.000000e+00> : vector<128xf32>
    %54 = vector.multi_reduction <add>, %53, %cst_19 [0] : vector<64x128xf32> to vector<128xf32>
    %55 = vector.shape_cast %54 : vector<128xf32> to vector<1x128xf32>
    %56 = tpu.concatenate %52, %55 in 0 : vector<1x128xf32>, vector<1x128xf32> -> vector<2x128xf32>
    %c0_20 = arith.constant 0 : index
    %c0_21 = arith.constant 0 : index
    %c0_22 = arith.constant 0 : index
    %c0_23 = arith.constant 0 : index
    %57 = vector.load %arg5[%c0_20, %c0_21, %c0_22, %c0_23] : memref<1x1x2x128xf32, #tpu.memory_space<vmem>>, vector<1x1x2x128xf32>
    %58 = vector.shape_cast %57 : vector<1x1x2x128xf32> to vector<2x128xf32>
    %59 = vector.shape_cast %56 : vector<2x128xf32> to vector<1x1x2x128xf32>
    tpu.vector_store %arg5[%c0_20, %c0_21, %c0_22, %c0_23], %59 {strides = array<i32>} : memref<1x1x2x128xf32, #tpu.memory_space<vmem>>, vector<1x1x2x128xf32>,
    return
  }
  func.func @transform_0(%arg0: i32, %arg1: i32) -> (i32, i32, i32, i32, i32) {
    %c0_i32 = arith.constant 0 : i32
    %c0_i32_0 = arith.constant 0 : i32
    %c0_i32_1 = arith.constant 0 : i32
    %c0_i32_2 = arith.constant 0 : i32
    %c0_i32_3 = arith.constant 0 : i32
    return %arg0, %c0_i32, %c0_i32_0, %c0_i32_1, %c0_i32_2 : i32, i32, i32, i32, i32
  }
  func.func @transform_1(%arg0: i32, %arg1: i32) -> (i32, i32) {
    %c0_i32 = arith.constant 0 : i32
    %c0_i32_0 = arith.constant 0 : i32
    %c0_i32_1 = arith.constant 0 : i32
    return %c0_i32, %c0_i32_0 : i32, i32
  }
  func.func @transform_2(%arg0: i32, %arg1: i32) -> (i32, i32, i32, i32) {
    %c0_i32 = arith.constant 0 : i32
    %c0_i32_0 = arith.constant 0 : i32
    %c0_i32_1 = arith.constant 0 : i32
    return %arg1, %arg0, %c0_i32, %c0_i32_0 : i32, i32, i32, i32
  }
  func.func @transform_3(%arg0: i32, %arg1: i32) -> (i32, i32, i32, i32) {
    %c0_i32 = arith.constant 0 : i32
    %c0_i32_0 = arith.constant 0 : i32
    %c0_i32_1 = arith.constant 0 : i32
    return %arg0, %arg1, %c0_i32, %c0_i32_0 : i32, i32, i32, i32
  }
}

module attributes {stable_mosaic.version = 11 : i64} {
  func.func @bn_lif_kernel(%arg0: i32, %arg1: memref<4x128x128xbf16, #tpu.memory_space<vmem>>, %arg2: memref<1x128xf32, #tpu.memory_space<vmem>>, %arg3: memref<1x128xf32, #tpu.memory_space<vmem>>, %arg4: memref<4x128x128xbf16, #tpu.memory_space<vmem>>) attributes {dimension_semantics = [#tpu.dimension_semantics<parallel>], iteration_bounds = array<i64: 1>, scalar_prefetch = 0 : i64, scratch_operands = 0 : i64, tpu.core_type = #tpu.core_type<tc>, window_params = [{transform_indices = @transform_0, window_bounds = array<i64: 4, 128, 128>}, {pipeline_mode = #tpu.pipeline_mode<synchronous>, transform_indices = @transform_1, window_bounds = array<i64: 1, 128>}, {pipeline_mode = #tpu.pipeline_mode<synchronous>, transform_indices = @transform_2, window_bounds = array<i64: 1, 128>}, {transform_indices = @transform_3, window_bounds = array<i64: 4, 128, 128>}]} {
    %c0 = arith.constant 0 : index
    %c0_0 = arith.constant 0 : index
    %0 = vector.load %arg2[%c0, %c0_0] : memref<1x128xf32, #tpu.memory_space<vmem>>, vector<1x128xf32>
    %1 = vector.shape_cast %0 : vector<1x128xf32> to vector<1x128xf32>
    %2 = vector.broadcast %1 : vector<1x128xf32> to vector<128x128xf32>
    %c0_1 = arith.constant 0 : index
    %c0_2 = arith.constant 0 : index
    %3 = vector.load %arg3[%c0_1, %c0_2] : memref<1x128xf32, #tpu.memory_space<vmem>>, vector<1x128xf32>
    %4 = vector.shape_cast %3 : vector<1x128xf32> to vector<1x128xf32>
    %5 = vector.broadcast %4 : vector<1x128xf32> to vector<128x128xf32>
    %cst = arith.constant 0.000000e+00 : f32
    %6 = vector.broadcast %cst : f32 to vector<128x128xf32>
    %c0_3 = arith.constant 0 : index
    %c0_4 = arith.constant 0 : index
    %c0_5 = arith.constant 0 : index
    %7 = vector.load %arg1[%c0_3, %c0_4, %c0_5] : memref<4x128x128xbf16, #tpu.memory_space<vmem>>, vector<1x128x128xbf16>
    %8 = vector.shape_cast %7 : vector<1x128x128xbf16> to vector<128x128xbf16>
    %9 = arith.extf %8 : vector<128x128xbf16> to vector<128x128xf32>
    %10 = arith.mulf %9, %2 : vector<128x128xf32>
    %11 = arith.addf %10, %5 : vector<128x128xf32>
    %cst_6 = arith.constant 5.000000e-01 : f32
    %12 = vector.broadcast %cst_6 : f32 to vector<128x128xf32>
    %13 = arith.mulf %6, %12 : vector<128x128xf32>
    %14 = arith.addf %13, %11 : vector<128x128xf32>
    %cst_7 = arith.constant 1.000000e+00 : f32
    %15 = vector.broadcast %cst_7 : f32 to vector<128x128xf32>
    %16 = arith.cmpf ogt, %14, %15 : vector<128x128xf32>
    %17 = arith.extui %16 : vector<128x128xi1> to vector<128x128xi32>
    %18 = arith.sitofp %17 : vector<128x128xi32> to vector<128x128xf32>
    %cst_8 = arith.constant 1.000000e+00 : f32
    %19 = vector.broadcast %cst_8 : f32 to vector<128x128xf32>
    %20 = arith.subf %19, %18 : vector<128x128xf32>
    %21 = arith.mulf %20, %14 : vector<128x128xf32>
    %22 = arith.truncf %18 : vector<128x128xf32> to vector<128x128xbf16>
    %c0_9 = arith.constant 0 : index
    %c0_10 = arith.constant 0 : index
    %c0_11 = arith.constant 0 : index
    %23 = vector.load %arg4[%c0_9, %c0_10, %c0_11] : memref<4x128x128xbf16, #tpu.memory_space<vmem>>, vector<1x128x128xbf16>
    %24 = vector.shape_cast %23 : vector<1x128x128xbf16> to vector<128x128xbf16>
    %25 = vector.shape_cast %22 : vector<128x128xbf16> to vector<1x128x128xbf16>
    tpu.vector_store %arg4[%c0_9, %c0_10, %c0_11], %25 {strides = array<i32>} : memref<4x128x128xbf16, #tpu.memory_space<vmem>>, vector<1x128x128xbf16>,
    %c1 = arith.constant 1 : index
    %c0_12 = arith.constant 0 : index
    %c0_13 = arith.constant 0 : index
    %26 = vector.load %arg1[%c1, %c0_12, %c0_13] : memref<4x128x128xbf16, #tpu.memory_space<vmem>>, vector<1x128x128xbf16>
    %27 = vector.shape_cast %26 : vector<1x128x128xbf16> to vector<128x128xbf16>
    %28 = arith.extf %27 : vector<128x128xbf16> to vector<128x128xf32>
    %29 = arith.mulf %28, %2 : vector<128x128xf32>
    %30 = arith.addf %29, %5 : vector<128x128xf32>
    %cst_14 = arith.constant 5.000000e-01 : f32
    %31 = vector.broadcast %cst_14 : f32 to vector<128x128xf32>
    %32 = arith.mulf %21, %31 : vector<128x128xf32>
    %33 = arith.addf %32, %30 : vector<128x128xf32>
    %cst_15 = arith.constant 1.000000e+00 : f32
    %34 = vector.broadcast %cst_15 : f32 to vector<128x128xf32>
    %35 = arith.cmpf ogt, %33, %34 : vector<128x128xf32>
    %36 = arith.extui %35 : vector<128x128xi1> to vector<128x128xi32>
    %37 = arith.sitofp %36 : vector<128x128xi32> to vector<128x128xf32>
    %cst_16 = arith.constant 1.000000e+00 : f32
    %38 = vector.broadcast %cst_16 : f32 to vector<128x128xf32>
    %39 = arith.subf %38, %37 : vector<128x128xf32>
    %40 = arith.mulf %39, %33 : vector<128x128xf32>
    %41 = arith.truncf %37 : vector<128x128xf32> to vector<128x128xbf16>
    %c1_17 = arith.constant 1 : index
    %c0_18 = arith.constant 0 : index
    %c0_19 = arith.constant 0 : index
    %42 = vector.load %arg4[%c1_17, %c0_18, %c0_19] : memref<4x128x128xbf16, #tpu.memory_space<vmem>>, vector<1x128x128xbf16>
    %43 = vector.shape_cast %42 : vector<1x128x128xbf16> to vector<128x128xbf16>
    %44 = vector.shape_cast %41 : vector<128x128xbf16> to vector<1x128x128xbf16>
    tpu.vector_store %arg4[%c1_17, %c0_18, %c0_19], %44 {strides = array<i32>} : memref<4x128x128xbf16, #tpu.memory_space<vmem>>, vector<1x128x128xbf16>,
    %c2 = arith.constant 2 : index
    %c0_20 = arith.constant 0 : index
    %c0_21 = arith.constant 0 : index
    %45 = vector.load %arg1[%c2, %c0_20, %c0_21] : memref<4x128x128xbf16, #tpu.memory_space<vmem>>, vector<1x128x128xbf16>
    %46 = vector.shape_cast %45 : vector<1x128x128xbf16> to vector<128x128xbf16>
    %47 = arith.extf %46 : vector<128x128xbf16> to vector<128x128xf32>
    %48 = arith.mulf %47, %2 : vector<128x128xf32>
    %49 = arith.addf %48, %5 : vector<128x128xf32>
    %cst_22 = arith.constant 5.000000e-01 : f32
    %50 = vector.broadcast %cst_22 : f32 to vector<128x128xf32>
    %51 = arith.mulf %40, %50 : vector<128x128xf32>
    %52 = arith.addf %51, %49 : vector<128x128xf32>
    %cst_23 = arith.constant 1.000000e+00 : f32
    %53 = vector.broadcast %cst_23 : f32 to vector<128x128xf32>
    %54 = arith.cmpf ogt, %52, %53 : vector<128x128xf32>
    %55 = arith.extui %54 : vector<128x128xi1> to vector<128x128xi32>
    %56 = arith.sitofp %55 : vector<128x128xi32> to vector<128x128xf32>
    %cst_24 = arith.constant 1.000000e+00 : f32
    %57 = vector.broadcast %cst_24 : f32 to vector<128x128xf32>
    %58 = arith.subf %57, %56 : vector<128x128xf32>
    %59 = arith.mulf %58, %52 : vector<128x128xf32>
    %60 = arith.truncf %56 : vector<128x128xf32> to vector<128x128xbf16>
    %c2_25 = arith.constant 2 : index
    %c0_26 = arith.constant 0 : index
    %c0_27 = arith.constant 0 : index
    %61 = vector.load %arg4[%c2_25, %c0_26, %c0_27] : memref<4x128x128xbf16, #tpu.memory_space<vmem>>, vector<1x128x128xbf16>
    %62 = vector.shape_cast %61 : vector<1x128x128xbf16> to vector<128x128xbf16>
    %63 = vector.shape_cast %60 : vector<128x128xbf16> to vector<1x128x128xbf16>
    tpu.vector_store %arg4[%c2_25, %c0_26, %c0_27], %63 {strides = array<i32>} : memref<4x128x128xbf16, #tpu.memory_space<vmem>>, vector<1x128x128xbf16>,
    %c3 = arith.constant 3 : index
    %c0_28 = arith.constant 0 : index
    %c0_29 = arith.constant 0 : index
    %64 = vector.load %arg1[%c3, %c0_28, %c0_29] : memref<4x128x128xbf16, #tpu.memory_space<vmem>>, vector<1x128x128xbf16>
    %65 = vector.shape_cast %64 : vector<1x128x128xbf16> to vector<128x128xbf16>
    %66 = arith.extf %65 : vector<128x128xbf16> to vector<128x128xf32>
    %67 = arith.mulf %66, %2 : vector<128x128xf32>
    %68 = arith.addf %67, %5 : vector<128x128xf32>
    %cst_30 = arith.constant 5.000000e-01 : f32
    %69 = vector.broadcast %cst_30 : f32 to vector<128x128xf32>
    %70 = arith.mulf %59, %69 : vector<128x128xf32>
    %71 = arith.addf %70, %68 : vector<128x128xf32>
    %cst_31 = arith.constant 1.000000e+00 : f32
    %72 = vector.broadcast %cst_31 : f32 to vector<128x128xf32>
    %73 = arith.cmpf ogt, %71, %72 : vector<128x128xf32>
    %74 = arith.extui %73 : vector<128x128xi1> to vector<128x128xi32>
    %75 = arith.sitofp %74 : vector<128x128xi32> to vector<128x128xf32>
    %76 = arith.truncf %75 : vector<128x128xf32> to vector<128x128xbf16>
    %c3_32 = arith.constant 3 : index
    %c0_33 = arith.constant 0 : index
    %c0_34 = arith.constant 0 : index
    %77 = vector.load %arg4[%c3_32, %c0_33, %c0_34] : memref<4x128x128xbf16, #tpu.memory_space<vmem>>, vector<1x128x128xbf16>
    %78 = vector.shape_cast %77 : vector<1x128x128xbf16> to vector<128x128xbf16>
    %79 = vector.shape_cast %76 : vector<128x128xbf16> to vector<1x128x128xbf16>
    tpu.vector_store %arg4[%c3_32, %c0_33, %c0_34], %79 {strides = array<i32>} : memref<4x128x128xbf16, #tpu.memory_space<vmem>>, vector<1x128x128xbf16>,
    return
  }
  func.func @transform_0(%arg0: i32) -> (i32, i32, i32) {
    %c0_i32 = arith.constant 0 : i32
    %c0_i32_0 = arith.constant 0 : i32
    %c0_i32_1 = arith.constant 0 : i32
    return %c0_i32, %arg0, %c0_i32_0 : i32, i32, i32
  }
  func.func @transform_1(%arg0: i32) -> (i32, i32) {
    %c0_i32 = arith.constant 0 : i32
    %c0_i32_0 = arith.constant 0 : i32
    %c0_i32_1 = arith.constant 0 : i32
    return %c0_i32, %c0_i32_0 : i32, i32
  }
  func.func @transform_2(%arg0: i32) -> (i32, i32) {
    %c0_i32 = arith.constant 0 : i32
    %c0_i32_0 = arith.constant 0 : i32
    %c0_i32_1 = arith.constant 0 : i32
    return %c0_i32, %c0_i32_0 : i32, i32
  }
  func.func @transform_3(%arg0: i32) -> (i32, i32, i32) {
    %c0_i32 = arith.constant 0 : i32
    %c0_i32_0 = arith.constant 0 : i32
    %c0_i32_1 = arith.constant 0 : i32
    return %c0_i32, %arg0, %c0_i32_0 : i32, i32, i32
  }
}

</mosaic_0001>

<llo_original>
// kernel: conv3d_snn_forward.3
$region0: #{conv3d_snn_forward.3}
  #allocation0 [shape = 'u32[]', space=smem, size = 0x4, offset = 0x4, fixed_abs, tag = 'smem constant byte address 0x4 - core index']
  #allocation1 [shape = 'u32[144,128]{1,0:T(1,128)}', space=vmem, size = 0x12000, scoped, tag = 'internal scratch']
  %s0 = inlined_call_operand.vmem [shape: bf16[4,128,128], index: 0, kind: input, shape index: {}]
  %s1 = inlined_call_operand.vmem [shape: f32[1,128], index: 1, kind: input, shape index: {}]
  %s2 = inlined_call_operand.vmem [shape: f32[1,128], index: 2, kind: input, shape index: {}]
  %s3 = inlined_call_operand.vmem [shape: bf16[4,128,128], index: 3, kind: output, shape index: {}]
  %s4 = sld [smem:[#allocation0]]
  $region22: #{conv3d_snn_forward.3} parent=0
    _
  %s6 = ssub.s32 1, %s4
  %s7 = scalar_select 0, %s6, %s4
  // Predicated region
  $region2: #{conv3d_snn_forward.3} parent=0 // pred_check
    _
  $region3: #{conv3d_snn_forward.3} parent=0 // pred_check_branch
    %9 = sbr.rel (0) target = $region5
  $region4: #{conv3d_snn_forward.3} parent=0 // pred_region
    _
  $region5: #{conv3d_snn_forward.3} parent=0 // pred_fallthru
    _
  // Predicated region
  $region6: #{conv3d_snn_forward.3} parent=0 // pred_check
    _
  $region7: #{conv3d_snn_forward.3} parent=0 // pred_check_branch
    %11 = sbr.rel (0) target = $region9
  $region8: #{conv3d_snn_forward.3} parent=0 // pred_region
    _
  $region9: #{conv3d_snn_forward.3} parent=0 // pred_fallthru
    _
  // Predicated region
  $region10: #{conv3d_snn_forward.3} parent=0 // pred_check
    _
  $region11: #{conv3d_snn_forward.3} parent=0 // pred_check_branch
    %13 = sbr.rel (0) target = $region13
  $region12: #{conv3d_snn_forward.3} parent=0 // pred_region
    _
  $region13: #{conv3d_snn_forward.3} parent=0 // pred_fallthru
    _
  %v14 = vld [vmem:[%s1] sm:$0x1]
  %v16 = vlaneseq
  %v17 = vshrl.u32 %v16, 7
  %v18 = vsub.s32 0, %v17
  %v19 = vrot.slane %v14, %v18
  %v21 = vld [vmem:[%s2] sm:$0x1]
  %v23 = vlaneseq
  %v24 = vshrl.u32 %v23, 7
  %v25 = vsub.s32 0, %v24
  %v26 = vrot.slane %v21, %v25
  %v28 = vld [vmem:[%s0] sm:$0xf]
  %v29 = vld [vmem:[%s0 + $0x4] sm:$0xf]
  %v30 = vld [vmem:[%s0 + $0x8] sm:$0xf]
  %v31 = vld [vmem:[%s0 + $0xc] sm:$0xf]
  %v32 = vld [vmem:[%s0 + $0x10] sm:$0xf]
  %v33 = vld [vmem:[%s0 + $0x14] sm:$0xf]
  %v34 = vld [vmem:[%s0 + $0x18] sm:$0xf]
  %v35 = vld [vmem:[%s0 + $0x1c] sm:$0xf]
  %v36 = vld [vmem:[%s0 + $0x20] sm:$0xf]
  %v37 = vld [vmem:[%s0 + $0x24] sm:$0xf]
  %v38 = vld [vmem:[%s0 + $0x28] sm:$0xf]
  %v39 = vld [vmem:[%s0 + $0x2c] sm:$0xf]
  %v40 = vld [vmem:[%s0 + $0x30] sm:$0xf]
  %v41 = vld [vmem:[%s0 + $0x34] sm:$0xf]
  %v42 = vld [vmem:[%s0 + $0x38] sm:$0xf]
  %v43 = vld [vmem:[%s0 + $0x3c] sm:$0xf]
  %v44 = vunpack.c.l.bf16 %v28
  %v45 = vunpack.c.l.bf16 %v29
  %v46 = vunpack.c.l.bf16 %v30
  %v47 = vunpack.c.l.bf16 %v31
  %v48 = vunpack.c.l.bf16 %v32
  %v49 = vunpack.c.l.bf16 %v33
  %v50 = vunpack.c.l.bf16 %v34
  %v51 = vunpack.c.l.bf16 %v35
  %v52 = vunpack.c.l.bf16 %v36
  %v53 = vunpack.c.l.bf16 %v37
  %v54 = vunpack.c.l.bf16 %v38
  %v55 = vunpack.c.l.bf16 %v39
  %v56 = vunpack.c.l.bf16 %v40
  %v57 = vunpack.c.l.bf16 %v41
  %v58 = vunpack.c.l.bf16 %v42
  %v59 = vunpack.c.l.bf16 %v43
  %v60 = vmul.f32 %v44, %v19
  %v61 = vmul.f32 %v45, %v19
  %v62 = vmul.f32 %v46, %v19
  %v63 = vmul.f32 %v47, %v19
  %v64 = vmul.f32 %v48, %v19
  %v65 = vmul.f32 %v49, %v19
  %v66 = vmul.f32 %v50, %v19
  %v67 = vmul.f32 %v51, %v19
  %v68 = vmul.f32 %v52, %v19
  %v69 = vmul.f32 %v53, %v19
  %v70 = vmul.f32 %v54, %v19
  %v71 = vmul.f32 %v55, %v19
  %v72 = vmul.f32 %v56, %v19
  %v73 = vmul.f32 %v57, %v19
  %v74 = vmul.f32 %v58, %v19
  %v75 = vmul.f32 %v59, %v19
  %v76 = vadd.f32 %v60, %v26
  %v77 = vadd.f32 %v61, %v26
  %v78 = vadd.f32 %v62, %v26
  %v79 = vadd.f32 %v63, %v26
  %v80 = vadd.f32 %v64, %v26
  %v81 = vadd.f32 %v65, %v26
  %v82 = vadd.f32 %v66, %v26
  %v83 = vadd.f32 %v67, %v26
  %v84 = vadd.f32 %v68, %v26
  %v85 = vadd.f32 %v69, %v26
  %v86 = vadd.f32 %v70, %v26
  %v87 = vadd.f32 %v71, %v26
  %v88 = vadd.f32 %v72, %v26
  %v89 = vadd.f32 %v73, %v26
  %v90 = vadd.f32 %v74, %v26
  %v91 = vadd.f32 %v75, %v26
  %v92 = vadd.f32 %v76, 0.0
  %v93 = vadd.f32 %v77, 0.0
  %v94 = vadd.f32 %v78, 0.0
  %v95 = vadd.f32 %v79, 0.0
  %v96 = vadd.f32 %v80, 0.0
  %v97 = vadd.f32 %v81, 0.0
  %v98 = vadd.f32 %v82, 0.0
  %v99 = vadd.f32 %v83, 0.0
  %v100 = vadd.f32 %v84, 0.0
  %v101 = vadd.f32 %v85, 0.0
  %v102 = vadd.f32 %v86, 0.0
  %v103 = vadd.f32 %v87, 0.0
  %v104 = vadd.f32 %v88, 0.0
  %v105 = vadd.f32 %v89, 0.0
  %v106 = vadd.f32 %v90, 0.0
  %v107 = vadd.f32 %v91, 0.0
  %vm108 = vcmp.gt.f32.partialorder %v92, 1.0
  %vm109 = vcmp.gt.f32.partialorder %v93, 1.0
  %vm110 = vcmp.gt.f32.partialorder %v94, 1.0
  %vm111 = vcmp.gt.f32.partialorder %v95, 1.0
  %vm112 = vcmp.gt.f32.partialorder %v96, 1.0
  %vm113 = vcmp.gt.f32.partialorder %v97, 1.0
  %vm114 = vcmp.gt.f32.partialorder %v98, 1.0
  %vm115 = vcmp.gt.f32.partialorder %v99, 1.0
  %vm116 = vcmp.gt.f32.partialorder %v100, 1.0
  %vm117 = vcmp.gt.f32.partialorder %v101, 1.0
  %vm118 = vcmp.gt.f32.partialorder %v102, 1.0
  %vm119 = vcmp.gt.f32.partialorder %v103, 1.0
  %vm120 = vcmp.gt.f32.partialorder %v104, 1.0
  %vm121 = vcmp.gt.f32.partialorder %v105, 1.0
  %vm122 = vcmp.gt.f32.partialorder %v106, 1.0
  %vm123 = vcmp.gt.f32.partialorder %v107, 1.0
  %v124 = vsel %vm108, 1, 0
  %v125 = vsel %vm109, 1, 0
  %v126 = vsel %vm110, 1, 0
  %v127 = vsel %vm111, 1, 0
  %v128 = vsel %vm112, 1, 0
  %v129 = vsel %vm113, 1, 0
  %v130 = vsel %vm114, 1, 0
  %v131 = vsel %vm115, 1, 0
  %v132 = vsel %vm116, 1, 0
  %v133 = vsel %vm117, 1, 0
  %v134 = vsel %vm118, 1, 0
  %v135 = vsel %vm119, 1, 0
  %v136 = vsel %vm120, 1, 0
  %v137 = vsel %vm121, 1, 0
  %v138 = vsel %vm122, 1, 0
  %v139 = vsel %vm123, 1, 0
  %v140 = vcvt.s32.f32 %v124
  %v141 = vcvt.s32.f32 %v125
  %v142 = vcvt.s32.f32 %v126
  %v143 = vcvt.s32.f32 %v127
  %v144 = vcvt.s32.f32 %v128
  %v145 = vcvt.s32.f32 %v129
  %v146 = vcvt.s32.f32 %v130
  %v147 = vcvt.s32.f32 %v131
  %v148 = vcvt.s32.f32 %v132
  %v149 = vcvt.s32.f32 %v133
  %v150 = vcvt.s32.f32 %v134
  %v151 = vcvt.s32.f32 %v135
  %v152 = vcvt.s32.f32 %v136
  %v153 = vcvt.s32.f32 %v137
  %v154 = vcvt.s32.f32 %v138
  %v155 = vcvt.s32.f32 %v139
  %v156 = vsub.f32 1.0, %v140
  %v157 = vsub.f32 1.0, %v141
  %v158 = vsub.f32 1.0, %v142
  %v159 = vsub.f32 1.0, %v143
  %v160 = vsub.f32 1.0, %v144
  %v161 = vsub.f32 1.0, %v145
  %v162 = vsub.f32 1.0, %v146
  %v163 = vsub.f32 1.0, %v147
  %v164 = vsub.f32 1.0, %v148
  %v165 = vsub.f32 1.0, %v149
  %v166 = vsub.f32 1.0, %v150
  %v167 = vsub.f32 1.0, %v151
  %v168 = vsub.f32 1.0, %v152
  %v169 = vsub.f32 1.0, %v153
  %v170 = vsub.f32 1.0, %v154
  %v171 = vsub.f32 1.0, %v155
  %v172 = vmul.f32 %v156, %v92
  %v173 = vmul.f32 %v157, %v93
  %v174 = vmul.f32 %v158, %v94
  %v175 = vmul.f32 %v159, %v95
  %v176 = vmul.f32 %v160, %v96
  %v177 = vmul.f32 %v161, %v97
  %v178 = vmul.f32 %v162, %v98
  %v179 = vmul.f32 %v163, %v99
  %v180 = vmul.f32 %v164, %v100
  %v181 = vmul.f32 %v165, %v101
  %v182 = vmul.f32 %v166, %v102
  %v183 = vmul.f32 %v167, %v103
  %v184 = vmul.f32 %v168, %v104
  %v185 = vmul.f32 %v169, %v105
  %v186 = vmul.f32 %v170, %v106
  %v187 = vmul.f32 %v171, %v107
  %v188 = vpack.c.bf16 %v141, %v140
  %v189 = vpack.c.bf16 %v143, %v142
  %v190 = vpack.c.bf16 %v145, %v144
  %v191 = vpack.c.bf16 %v147, %v146
  %v192 = vpack.c.bf16 %v149, %v148
  %v193 = vpack.c.bf16 %v151, %v150
  %v194 = vpack.c.bf16 %v153, %v152
  %v195 = vpack.c.bf16 %v155, %v154
  %v204 = vunpack.c.l.b16 %v188
  %v205 = vunpack.c.h.b16 %v188
  %v206 = vunpack.c.l.b16 %v189
  %v207 = vunpack.c.h.b16 %v189
  %v208 = vunpack.c.l.b16 %v190
  %v209 = vunpack.c.h.b16 %v190
  %v210 = vunpack.c.l.b16 %v191
  %v211 = vunpack.c.h.b16 %v191
  %v212 = vunpack.c.l.b16 %v192
  %v213 = vunpack.c.h.b16 %v192
  %v214 = vunpack.c.l.b16 %v193
  %v215 = vunpack.c.h.b16 %v193
  %v216 = vunpack.c.l.b16 %v194
  %v217 = vunpack.c.h.b16 %v194
  %v218 = vunpack.c.l.b16 %v195
  %v219 = vunpack.c.h.b16 %v195
  %v220 = vpack.c.b16 %v204, %v204
  %v221 = vpack.c.b16 %v205, %v205
  %v222 = vpack.c.b16 %v206, %v206
  %v223 = vpack.c.b16 %v207, %v207
  %v224 = vpack.c.b16 %v208, %v208
  %v225 = vpack.c.b16 %v209, %v209
  %v226 = vpack.c.b16 %v210, %v210
  %v227 = vpack.c.b16 %v211, %v211
  %v228 = vpack.c.b16 %v212, %v212
  %v229 = vpack.c.b16 %v213, %v213
  %v230 = vpack.c.b16 %v214, %v214
  %v231 = vpack.c.b16 %v215, %v215
  %v232 = vpack.c.b16 %v216, %v216
  %v233 = vpack.c.b16 %v217, %v217
  %v234 = vpack.c.b16 %v218, %v218
  %v235 = vpack.c.b16 %v219, %v219
  %252 = vst [vmem:[%s3] sm:$0xf] %v220
  %253 = vst [vmem:[%s3 + $0x4] sm:$0xf] %v221
  %254 = vst [vmem:[%s3 + $0x8] sm:$0xf] %v222
  %255 = vst [vmem:[%s3 + $0xc] sm:$0xf] %v223
  %256 = vst [vmem:[%s3 + $0x10] sm:$0xf] %v224
  %257 = vst [vmem:[%s3 + $0x14] sm:$0xf] %v225
  %258 = vst [vmem:[%s3 + $0x18] sm:$0xf] %v226
  %259 = vst [vmem:[%s3 + $0x1c] sm:$0xf] %v227
  %260 = vst [vmem:[%s3 + $0x20] sm:$0xf] %v228
  %261 = vst [vmem:[%s3 + $0x24] sm:$0xf] %v229
  %262 = vst [vmem:[%s3 + $0x28] sm:$0xf] %v230
  %263 = vst [vmem:[%s3 + $0x2c] sm:$0xf] %v231
  %264 = vst [vmem:[%s3 + $0x30] sm:$0xf] %v232
  %265 = vst [vmem:[%s3 + $0x34] sm:$0xf] %v233
  %266 = vst [vmem:[%s3 + $0x38] sm:$0xf] %v234
  %267 = vst [vmem:[%s3 + $0x3c] sm:$0xf] %v235
  %s268 = scalar_lea.vmem %s0, 64
  %v269 = vld [vmem:[%s268] sm:$0xf]
  %v270 = vld [vmem:[%s268 + $0x4] sm:$0xf]
  %v271 = vld [vmem:[%s268 + $0x8] sm:$0xf]
  %v272 = vld [vmem:[%s268 + $0xc] sm:$0xf]
  %v273 = vld [vmem:[%s268 + $0x10] sm:$0xf]
  %v274 = vld [vmem:[%s268 + $0x14] sm:$0xf]
  %v275 = vld [vmem:[%s268 + $0x18] sm:$0xf]
  %v276 = vld [vmem:[%s268 + $0x1c] sm:$0xf]
  %v277 = vld [vmem:[%s268 + $0x20] sm:$0xf]
  %v278 = vld [vmem:[%s268 + $0x24] sm:$0xf]
  %v279 = vld [vmem:[%s268 + $0x28] sm:$0xf]
  %v280 = vld [vmem:[%s268 + $0x2c] sm:$0xf]
  %v281 = vld [vmem:[%s268 + $0x30] sm:$0xf]
  %v282 = vld [vmem:[%s268 + $0x34] sm:$0xf]
  %v283 = vld [vmem:[%s268 + $0x38] sm:$0xf]
  %v284 = vld [vmem:[%s268 + $0x3c] sm:$0xf]
  %v285 = vunpack.c.l.bf16 %v269
  %v286 = vunpack.c.l.bf16 %v270
  %v287 = vunpack.c.l.bf16 %v271
  %v288 = vunpack.c.l.bf16 %v272
  %v289 = vunpack.c.l.bf16 %v273
  %v290 = vunpack.c.l.bf16 %v274
  %v291 = vunpack.c.l.bf16 %v275
  %v292 = vunpack.c.l.bf16 %v276
  %v293 = vunpack.c.l.bf16 %v277
  %v294 = vunpack.c.l.bf16 %v278
  %v295 = vunpack.c.l.bf16 %v279
  %v296 = vunpack.c.l.bf16 %v280
  %v297 = vunpack.c.l.bf16 %v281
  %v298 = vunpack.c.l.bf16 %v282
  %v299 = vunpack.c.l.bf16 %v283
  %v300 = vunpack.c.l.bf16 %v284
  %v301 = vmul.f32 %v285, %v19
  %v302 = vmul.f32 %v286, %v19
  %v303 = vmul.f32 %v287, %v19
  %v304 = vmul.f32 %v288, %v19
  %v305 = vmul.f32 %v289, %v19
  %v306 = vmul.f32 %v290, %v19
  %v307 = vmul.f32 %v291, %v19
  %v308 = vmul.f32 %v292, %v19
  %v309 = vmul.f32 %v293, %v19
  %v310 = vmul.f32 %v294, %v19
  %v311 = vmul.f32 %v295, %v19
  %v312 = vmul.f32 %v296, %v19
  %v313 = vmul.f32 %v297, %v19
  %v314 = vmul.f32 %v298, %v19
  %v315 = vmul.f32 %v299, %v19
  %v316 = vmul.f32 %v300, %v19
  %v317 = vadd.f32 %v301, %v26
  %v318 = vadd.f32 %v302, %v26
  %v319 = vadd.f32 %v303, %v26
  %v320 = vadd.f32 %v304, %v26
  %v321 = vadd.f32 %v305, %v26
  %v322 = vadd.f32 %v306, %v26
  %v323 = vadd.f32 %v307, %v26
  %v324 = vadd.f32 %v308, %v26
  %v325 = vadd.f32 %v309, %v26
  %v326 = vadd.f32 %v310, %v26
  %v327 = vadd.f32 %v311, %v26
  %v328 = vadd.f32 %v312, %v26
  %v329 = vadd.f32 %v313, %v26
  %v330 = vadd.f32 %v314, %v26
  %v331 = vadd.f32 %v315, %v26
  %v332 = vadd.f32 %v316, %v26
  %v333 = vmul.f32 %v172, 0.5
  %v334 = vmul.f32 %v173, 0.5
  %v335 = vmul.f32 %v174, 0.5
  %v336 = vmul.f32 %v175, 0.5
  %v337 = vmul.f32 %v176, 0.5
  %v338 = vmul.f32 %v177, 0.5
  %v339 = vmul.f32 %v178, 0.5
  %v340 = vmul.f32 %v179, 0.5
  %v341 = vmul.f32 %v180, 0.5
  %v342 = vmul.f32 %v181, 0.5
  %v343 = vmul.f32 %v182, 0.5
  %v344 = vmul.f32 %v183, 0.5
  %v345 = vmul.f32 %v184, 0.5
  %v346 = vmul.f32 %v185, 0.5
  %v347 = vmul.f32 %v186, 0.5
  %v348 = vmul.f32 %v187, 0.5
  %v349 = vadd.f32 %v333, %v317
  %v350 = vadd.f32 %v334, %v318
  %v351 = vadd.f32 %v335, %v319
  %v352 = vadd.f32 %v336, %v320
  %v353 = vadd.f32 %v337, %v321
  %v354 = vadd.f32 %v338, %v322
  %v355 = vadd.f32 %v339, %v323
  %v356 = vadd.f32 %v340, %v324
  %v357 = vadd.f32 %v341, %v325
  %v358 = vadd.f32 %v342, %v326
  %v359 = vadd.f32 %v343, %v327
  %v360 = vadd.f32 %v344, %v328
  %v361 = vadd.f32 %v345, %v329
  %v362 = vadd.f32 %v346, %v330
  %v363 = vadd.f32 %v347, %v331
  %v364 = vadd.f32 %v348, %v332
  %vm365 = vcmp.gt.f32.partialorder %v349, 1.0
  %vm366 = vcmp.gt.f32.partialorder %v350, 1.0
  %vm367 = vcmp.gt.f32.partialorder %v351, 1.0
  %vm368 = vcmp.gt.f32.partialorder %v352, 1.0
  %vm369 = vcmp.gt.f32.partialorder %v353, 1.0
  %vm370 = vcmp.gt.f32.partialorder %v354, 1.0
  %vm371 = vcmp.gt.f32.partialorder %v355, 1.0
  %vm372 = vcmp.gt.f32.partialorder %v356, 1.0
  %vm373 = vcmp.gt.f32.partialorder %v357, 1.0
  %vm374 = vcmp.gt.f32.partialorder %v358, 1.0
  %vm375 = vcmp.gt.f32.partialorder %v359, 1.0
  %vm376 = vcmp.gt.f32.partialorder %v360, 1.0
  %vm377 = vcmp.gt.f32.partialorder %v361, 1.0
  %vm378 = vcmp.gt.f32.partialorder %v362, 1.0
  %vm379 = vcmp.gt.f32.partialorder %v363, 1.0
  %vm380 = vcmp.gt.f32.partialorder %v364, 1.0
  %v381 = vsel %vm365, 1, 0
  %v382 = vsel %vm366, 1, 0
  %v383 = vsel %vm367, 1, 0
  %v384 = vsel %vm368, 1, 0
  %v385 = vsel %vm369, 1, 0
  %v386 = vsel %vm370, 1, 0
  %v387 = vsel %vm371, 1, 0
  %v388 = vsel %vm372, 1, 0
  %v389 = vsel %vm373, 1, 0
  %v390 = vsel %vm374, 1, 0
  %v391 = vsel %vm375, 1, 0
  %v392 = vsel %vm376, 1, 0
  %v393 = vsel %vm377, 1, 0
  %v394 = vsel %vm378, 1, 0
  %v395 = vsel %vm379, 1, 0
  %v396 = vsel %vm380, 1, 0
  %v397 = vcvt.s32.f32 %v381
  %v398 = vcvt.s32.f32 %v382
  %v399 = vcvt.s32.f32 %v383
  %v400 = vcvt.s32.f32 %v384
  %v401 = vcvt.s32.f32 %v385
  %v402 = vcvt.s32.f32 %v386
  %v403 = vcvt.s32.f32 %v387
  %v404 = vcvt.s32.f32 %v388
  %v405 = vcvt.s32.f32 %v389
  %v406 = vcvt.s32.f32 %v390
  %v407 = vcvt.s32.f32 %v391
  %v408 = vcvt.s32.f32 %v392
  %v409 = vcvt.s32.f32 %v393
  %v410 = vcvt.s32.f32 %v394
  %v411 = vcvt.s32.f32 %v395
  %v412 = vcvt.s32.f32 %v396
  %v413 = vsub.f32 1.0, %v397
  %v414 = vsub.f32 1.0, %v398
  %v415 = vsub.f32 1.0, %v399
  %v416 = vsub.f32 1.0, %v400
  %v417 = vsub.f32 1.0, %v401
  %v418 = vsub.f32 1.0, %v402
  %v419 = vsub.f32 1.0, %v403
  %v420 = vsub.f32 1.0, %v404
  %v421 = vsub.f32 1.0, %v405
  %v422 = vsub.f32 1.0, %v406
  %v423 = vsub.f32 1.0, %v407
  %v424 = vsub.f32 1.0, %v408
  %v425 = vsub.f32 1.0, %v409
  %v426 = vsub.f32 1.0, %v410
  %v427 = vsub.f32 1.0, %v411
  %v428 = vsub.f32 1.0, %v412
  %v429 = vmul.f32 %v413, %v349
  %v430 = vmul.f32 %v414, %v350
  %v431 = vmul.f32 %v415, %v351
  %v432 = vmul.f32 %v416, %v352
  %v433 = vmul.f32 %v417, %v353
  %v434 = vmul.f32 %v418, %v354
  %v435 = vmul.f32 %v419, %v355
  %v436 = vmul.f32 %v420, %v356
  %v437 = vmul.f32 %v421, %v357
  %v438 = vmul.f32 %v422, %v358
  %v439 = vmul.f32 %v423, %v359
  %v440 = vmul.f32 %v424, %v360
  %v441 = vmul.f32 %v425, %v361
  %v442 = vmul.f32 %v426, %v362
  %v443 = vmul.f32 %v427, %v363
  %v444 = vmul.f32 %v428, %v364
  %v445 = vpack.c.bf16 %v398, %v397
  %v446 = vpack.c.bf16 %v400, %v399
  %v447 = vpack.c.bf16 %v402, %v401
  %v448 = vpack.c.bf16 %v404, %v403
  %v449 = vpack.c.bf16 %v406, %v405
  %v450 = vpack.c.bf16 %v408, %v407
  %v451 = vpack.c.bf16 %v410, %v409
  %v452 = vpack.c.bf16 %v412, %v411
  %v461 = vunpack.c.l.b16 %v445
  %v462 = vunpack.c.h.b16 %v445
  %v463 = vunpack.c.l.b16 %v446
  %v464 = vunpack.c.h.b16 %v446
  %v465 = vunpack.c.l.b16 %v447
  %v466 = vunpack.c.h.b16 %v447
  %v467 = vunpack.c.l.b16 %v448
  %v468 = vunpack.c.h.b16 %v448
  %v469 = vunpack.c.l.b16 %v449
  %v470 = vunpack.c.h.b16 %v449
  %v471 = vunpack.c.l.b16 %v450
  %v472 = vunpack.c.h.b16 %v450
  %v473 = vunpack.c.l.b16 %v451
  %v474 = vunpack.c.h.b16 %v451
  %v475 = vunpack.c.l.b16 %v452
  %v476 = vunpack.c.h.b16 %v452
  %v477 = vpack.c.b16 %v461, %v461
  %v478 = vpack.c.b16 %v462, %v462
  %v479 = vpack.c.b16 %v463, %v463
  %v480 = vpack.c.b16 %v464, %v464
  %v481 = vpack.c.b16 %v465, %v465
  %v482 = vpack.c.b16 %v466, %v466
  %v483 = vpack.c.b16 %v467, %v467
  %v484 = vpack.c.b16 %v468, %v468
  %v485 = vpack.c.b16 %v469, %v469
  %v486 = vpack.c.b16 %v470, %v470
  %v487 = vpack.c.b16 %v471, %v471
  %v488 = vpack.c.b16 %v472, %v472
  %v489 = vpack.c.b16 %v473, %v473
  %v490 = vpack.c.b16 %v474, %v474
  %v491 = vpack.c.b16 %v475, %v475
  %v492 = vpack.c.b16 %v476, %v476
  %s509 = scalar_lea.vmem %s3, 64
  %510 = vst [vmem:[%s509] sm:$0xf] %v477
  %511 = vst [vmem:[%s509 + $0x4] sm:$0xf] %v478
  %512 = vst [vmem:[%s509 + $0x8] sm:$0xf] %v479
  %513 = vst [vmem:[%s509 + $0xc] sm:$0xf] %v480
  %514 = vst [vmem:[%s509 + $0x10] sm:$0xf] %v481
  %515 = vst [vmem:[%s509 + $0x14] sm:$0xf] %v482
  %516 = vst [vmem:[%s509 + $0x18] sm:$0xf] %v483
  %517 = vst [vmem:[%s509 + $0x1c] sm:$0xf] %v484
  %518 = vst [vmem:[%s509 + $0x20] sm:$0xf] %v485
  %519 = vst [vmem:[%s509 + $0x24] sm:$0xf] %v486
  %520 = vst [vmem:[%s509 + $0x28] sm:$0xf] %v487
  %521 = vst [vmem:[%s509 + $0x2c] sm:$0xf] %v488
  %522 = vst [vmem:[%s509 + $0x30] sm:$0xf] %v489
  %523 = vst [vmem:[%s509 + $0x34] sm:$0xf] %v490
  %524 = vst [vmem:[%s509 + $0x38] sm:$0xf] %v491
  %525 = vst [vmem:[%s509 + $0x3c] sm:$0xf] %v492
  %s526 = scalar_lea.vmem %s0, 128
  %v527 = vld [vmem:[%s526] sm:$0xf]
  %v528 = vld [vmem:[%s526 + $0x4] sm:$0xf]
  %v529 = vld [vmem:[%s526 + $0x8] sm:$0xf]
  %v530 = vld [vmem:[%s526 + $0xc] sm:$0xf]
  %v531 = vld [vmem:[%s526 + $0x10] sm:$0xf]
  %v532 = vld [vmem:[%s526 + $0x14] sm:$0xf]
  %v533 = vld [vmem:[%s526 + $0x18] sm:$0xf]
  %v534 = vld [vmem:[%s526 + $0x1c] sm:$0xf]
  %v535 = vld [vmem:[%s526 + $0x20] sm:$0xf]
  %v536 = vld [vmem:[%s526 + $0x24] sm:$0xf]
  %v537 = vld [vmem:[%s526 + $0x28] sm:$0xf]
  %v538 = vld [vmem:[%s526 + $0x2c] sm:$0xf]
  %v539 = vld [vmem:[%s526 + $0x30] sm:$0xf]
  %v540 = vld [vmem:[%s526 + $0x34] sm:$0xf]
  %v541 = vld [vmem:[%s526 + $0x38] sm:$0xf]
  %v542 = vld [vmem:[%s526 + $0x3c] sm:$0xf]
  %v543 = vunpack.c.l.bf16 %v527
  %v544 = vunpack.c.l.bf16 %v528
  %v545 = vunpack.c.l.bf16 %v529
  %v546 = vunpack.c.l.bf16 %v530
  %v547 = vunpack.c.l.bf16 %v531
  %v548 = vunpack.c.l.bf16 %v532
  %v549 = vunpack.c.l.bf16 %v533
  %v550 = vunpack.c.l.bf16 %v534
  %v551 = vunpack.c.l.bf16 %v535
  %v552 = vunpack.c.l.bf16 %v536
  %v553 = vunpack.c.l.bf16 %v537
  %v554 = vunpack.c.l.bf16 %v538
  %v555 = vunpack.c.l.bf16 %v539
  %v556 = vunpack.c.l.bf16 %v540
  %v557 = vunpack.c.l.bf16 %v541
  %v558 = vunpack.c.l.bf16 %v542
  %v559 = vmul.f32 %v543, %v19
  %v560 = vmul.f32 %v544, %v19
  %v561 = vmul.f32 %v545, %v19
  %v562 = vmul.f32 %v546, %v19
  %v563 = vmul.f32 %v547, %v19
  %v564 = vmul.f32 %v548, %v19
  %v565 = vmul.f32 %v549, %v19
  %v566 = vmul.f32 %v550, %v19
  %v567 = vmul.f32 %v551, %v19
  %v568 = vmul.f32 %v552, %v19
  %v569 = vmul.f32 %v553, %v19
  %v570 = vmul.f32 %v554, %v19
  %v571 = vmul.f32 %v555, %v19
  %v572 = vmul.f32 %v556, %v19
  %v573 = vmul.f32 %v557, %v19
  %v574 = vmul.f32 %v558, %v19
  %v575 = vadd.f32 %v559, %v26
  %v576 = vadd.f32 %v560, %v26
  %v577 = vadd.f32 %v561, %v26
  %v578 = vadd.f32 %v562, %v26
  %v579 = vadd.f32 %v563, %v26
  %v580 = vadd.f32 %v564, %v26
  %v581 = vadd.f32 %v565, %v26
  %v582 = vadd.f32 %v566, %v26
  %v583 = vadd.f32 %v567, %v26
  %v584 = vadd.f32 %v568, %v26
  %v585 = vadd.f32 %v569, %v26
  %v586 = vadd.f32 %v570, %v26
  %v587 = vadd.f32 %v571, %v26
  %v588 = vadd.f32 %v572, %v26
  %v589 = vadd.f32 %v573, %v26
  %v590 = vadd.f32 %v574, %v26
  %v591 = vmul.f32 %v429, 0.5
  %v592 = vmul.f32 %v430, 0.5
  %v593 = vmul.f32 %v431, 0.5
  %v594 = vmul.f32 %v432, 0.5
  %v595 = vmul.f32 %v433, 0.5
  %v596 = vmul.f32 %v434, 0.5
  %v597 = vmul.f32 %v435, 0.5
  %v598 = vmul.f32 %v436, 0.5
  %v599 = vmul.f32 %v437, 0.5
  %v600 = vmul.f32 %v438, 0.5
  %v601 = vmul.f32 %v439, 0.5
  %v602 = vmul.f32 %v440, 0.5
  %v603 = vmul.f32 %v441, 0.5
  %v604 = vmul.f32 %v442, 0.5
  %v605 = vmul.f32 %v443, 0.5
  %v606 = vmul.f32 %v444, 0.5
  %v607 = vadd.f32 %v591, %v575
  %v608 = vadd.f32 %v592, %v576
  %v609 = vadd.f32 %v593, %v577
  %v610 = vadd.f32 %v594, %v578
  %v611 = vadd.f32 %v595, %v579
  %v612 = vadd.f32 %v596, %v580
  %v613 = vadd.f32 %v597, %v581
  %v614 = vadd.f32 %v598, %v582
  %v615 = vadd.f32 %v599, %v583
  %v616 = vadd.f32 %v600, %v584
  %v617 = vadd.f32 %v601, %v585
  %v618 = vadd.f32 %v602, %v586
  %v619 = vadd.f32 %v603, %v587
  %v620 = vadd.f32 %v604, %v588
  %v621 = vadd.f32 %v605, %v589
  %v622 = vadd.f32 %v606, %v590
  %vm623 = vcmp.gt.f32.partialorder %v607, 1.0
  %vm624 = vcmp.gt.f32.partialorder %v608, 1.0
  %vm625 = vcmp.gt.f32.partialorder %v609, 1.0
  %vm626 = vcmp.gt.f32.partialorder %v610, 1.0
  %vm627 = vcmp.gt.f32.partialorder %v611, 1.0
  %vm628 = vcmp.gt.f32.partialorder %v612, 1.0
  %vm629 = vcmp.gt.f32.partialorder %v613, 1.0
  %vm630 = vcmp.gt.f32.partialorder %v614, 1.0
  %vm631 = vcmp.gt.f32.partialorder %v615, 1.0
  %vm632 = vcmp.gt.f32.partialorder %v616, 1.0
  %vm633 = vcmp.gt.f32.partialorder %v617, 1.0
  %vm634 = vcmp.gt.f32.partialorder %v618, 1.0
  %vm635 = vcmp.gt.f32.partialorder %v619, 1.0
  %vm636 = vcmp.gt.f32.partialorder %v620, 1.0
  %vm637 = vcmp.gt.f32.partialorder %v621, 1.0
  %vm638 = vcmp.gt.f32.partialorder %v622, 1.0
  %v639 = vsel %vm623, 1, 0
  %v640 = vsel %vm624, 1, 0
  %v641 = vsel %vm625, 1, 0
  %v642 = vsel %vm626, 1, 0
  %v643 = vsel %vm627, 1, 0
  %v644 = vsel %vm628, 1, 0
  %v645 = vsel %vm629, 1, 0
  %v646 = vsel %vm630, 1, 0
  %v647 = vsel %vm631, 1, 0
  %v648 = vsel %vm632, 1, 0
  %v649 = vsel %vm633, 1, 0
  %v650 = vsel %vm634, 1, 0
  %v651 = vsel %vm635, 1, 0
  %v652 = vsel %vm636, 1, 0
  %v653 = vsel %vm637, 1, 0
  %v654 = vsel %vm638, 1, 0
  %v655 = vcvt.s32.f32 %v639
  %v656 = vcvt.s32.f32 %v640
  %v657 = vcvt.s32.f32 %v641
  %v658 = vcvt.s32.f32 %v642
  %v659 = vcvt.s32.f32 %v643
  %v660 = vcvt.s32.f32 %v644
  %v661 = vcvt.s32.f32 %v645
  %v662 = vcvt.s32.f32 %v646
  %v663 = vcvt.s32.f32 %v647
  %v664 = vcvt.s32.f32 %v648
  %v665 = vcvt.s32.f32 %v649
  %v666 = vcvt.s32.f32 %v650
  %v667 = vcvt.s32.f32 %v651
  %v668 = vcvt.s32.f32 %v652
  %v669 = vcvt.s32.f32 %v653
  %v670 = vcvt.s32.f32 %v654
  %v671 = vsub.f32 1.0, %v655
  %v672 = vsub.f32 1.0, %v656
  %v673 = vsub.f32 1.0, %v657
  %v674 = vsub.f32 1.0, %v658
  %v675 = vsub.f32 1.0, %v659
  %v676 = vsub.f32 1.0, %v660
  %v677 = vsub.f32 1.0, %v661
  %v678 = vsub.f32 1.0, %v662
  %v679 = vsub.f32 1.0, %v663
  %v680 = vsub.f32 1.0, %v664
  %v681 = vsub.f32 1.0, %v665
  %v682 = vsub.f32 1.0, %v666
  %v683 = vsub.f32 1.0, %v667
  %v684 = vsub.f32 1.0, %v668
  %v685 = vsub.f32 1.0, %v669
  %v686 = vsub.f32 1.0, %v670
  %v687 = vmul.f32 %v671, %v607
  %v688 = vmul.f32 %v672, %v608
  %v689 = vmul.f32 %v673, %v609
  %v690 = vmul.f32 %v674, %v610
  %v691 = vmul.f32 %v675, %v611
  %v692 = vmul.f32 %v676, %v612
  %v693 = vmul.f32 %v677, %v613
  %v694 = vmul.f32 %v678, %v614
  %v695 = vmul.f32 %v679, %v615
  %v696 = vmul.f32 %v680, %v616
  %v697 = vmul.f32 %v681, %v617
  %v698 = vmul.f32 %v682, %v618
  %v699 = vmul.f32 %v683, %v619
  %v700 = vmul.f32 %v684, %v620
  %v701 = vmul.f32 %v685, %v621
  %v702 = vmul.f32 %v686, %v622
  %v703 = vpack.c.bf16 %v656, %v655
  %v704 = vpack.c.bf16 %v658, %v657
  %v705 = vpack.c.bf16 %v660, %v659
  %v706 = vpack.c.bf16 %v662, %v661
  %v707 = vpack.c.bf16 %v664, %v663
  %v708 = vpack.c.bf16 %v666, %v665
  %v709 = vpack.c.bf16 %v668, %v667
  %v710 = vpack.c.bf16 %v670, %v669
  %v719 = vunpack.c.l.b16 %v703
  %v720 = vunpack.c.h.b16 %v703
  %v721 = vunpack.c.l.b16 %v704
  %v722 = vunpack.c.h.b16 %v704
  %v723 = vunpack.c.l.b16 %v705
  %v724 = vunpack.c.h.b16 %v705
  %v725 = vunpack.c.l.b16 %v706
  %v726 = vunpack.c.h.b16 %v706
  %v727 = vunpack.c.l.b16 %v707
  %v728 = vunpack.c.h.b16 %v707
  %v729 = vunpack.c.l.b16 %v708
  %v730 = vunpack.c.h.b16 %v708
  %v731 = vunpack.c.l.b16 %v709
  %v732 = vunpack.c.h.b16 %v709
  %v733 = vunpack.c.l.b16 %v710
  %v734 = vunpack.c.h.b16 %v710
  %v735 = vpack.c.b16 %v719, %v719
  %v736 = vpack.c.b16 %v720, %v720
  %v737 = vpack.c.b16 %v721, %v721
  %v738 = vpack.c.b16 %v722, %v722
  %v739 = vpack.c.b16 %v723, %v723
  %v740 = vpack.c.b16 %v724, %v724
  %v741 = vpack.c.b16 %v725, %v725
  %v742 = vpack.c.b16 %v726, %v726
  %v743 = vpack.c.b16 %v727, %v727
  %v744 = vpack.c.b16 %v728, %v728
  %v745 = vpack.c.b16 %v729, %v729
  %v746 = vpack.c.b16 %v730, %v730
  %v747 = vpack.c.b16 %v731, %v731
  %v748 = vpack.c.b16 %v732, %v732
  %v749 = vpack.c.b16 %v733, %v733
  %v750 = vpack.c.b16 %v734, %v734
  %s767 = scalar_lea.vmem %s3, 128
  %768 = vst [vmem:[%s767] sm:$0xf] %v735
  %769 = vst [vmem:[%s767 + $0x4] sm:$0xf] %v736
  %770 = vst [vmem:[%s767 + $0x8] sm:$0xf] %v737
  %771 = vst [vmem:[%s767 + $0xc] sm:$0xf] %v738
  %772 = vst [vmem:[%s767 + $0x10] sm:$0xf] %v739
  %773 = vst [vmem:[%s767 + $0x14] sm:$0xf] %v740
  %774 = vst [vmem:[%s767 + $0x18] sm:$0xf] %v741
  %775 = vst [vmem:[%s767 + $0x1c] sm:$0xf] %v742
  %776 = vst [vmem:[%s767 + $0x20] sm:$0xf] %v743
  %777 = vst [vmem:[%s767 + $0x24] sm:$0xf] %v744
  %778 = vst [vmem:[%s767 + $0x28] sm:$0xf] %v745
  %779 = vst [vmem:[%s767 + $0x2c] sm:$0xf] %v746
  %780 = vst [vmem:[%s767 + $0x30] sm:$0xf] %v747
  %781 = vst [vmem:[%s767 + $0x34] sm:$0xf] %v748
  %782 = vst [vmem:[%s767 + $0x38] sm:$0xf] %v749
  %783 = vst [vmem:[%s767 + $0x3c] sm:$0xf] %v750
  %s784 = scalar_lea.vmem %s0, 192
  %v785 = vld [vmem:[%s784] sm:$0xf]
  %v786 = vld [vmem:[%s784 + $0x4] sm:$0xf]
  %v787 = vld [vmem:[%s784 + $0x8] sm:$0xf]
  %v788 = vld [vmem:[%s784 + $0xc] sm:$0xf]
  %v789 = vld [vmem:[%s784 + $0x10] sm:$0xf]
  %v790 = vld [vmem:[%s784 + $0x14] sm:$0xf]
  %v791 = vld [vmem:[%s784 + $0x18] sm:$0xf]
  %v792 = vld [vmem:[%s784 + $0x1c] sm:$0xf]
  %v793 = vld [vmem:[%s784 + $0x20] sm:$0xf]
  %v794 = vld [vmem:[%s784 + $0x24] sm:$0xf]
  %v795 = vld [vmem:[%s784 + $0x28] sm:$0xf]
  %v796 = vld [vmem:[%s784 + $0x2c] sm:$0xf]
  %v797 = vld [vmem:[%s784 + $0x30] sm:$0xf]
  %v798 = vld [vmem:[%s784 + $0x34] sm:$0xf]
  %v799 = vld [vmem:[%s784 + $0x38] sm:$0xf]
  %v800 = vld [vmem:[%s784 + $0x3c] sm:$0xf]
  %v801 = vunpack.c.l.bf16 %v785
  %v802 = vunpack.c.l.bf16 %v786
  %v803 = vunpack.c.l.bf16 %v787
  %v804 = vunpack.c.l.bf16 %v788
  %v805 = vunpack.c.l.bf16 %v789
  %v806 = vunpack.c.l.bf16 %v790
  %v807 = vunpack.c.l.bf16 %v791
  %v808 = vunpack.c.l.bf16 %v792
  %v809 = vunpack.c.l.bf16 %v793
  %v810 = vunpack.c.l.bf16 %v794
  %v811 = vunpack.c.l.bf16 %v795
  %v812 = vunpack.c.l.bf16 %v796
  %v813 = vunpack.c.l.bf16 %v797
  %v814 = vunpack.c.l.bf16 %v798
  %v815 = vunpack.c.l.bf16 %v799
  %v816 = vunpack.c.l.bf16 %v800
  %v817 = vmul.f32 %v801, %v19
  %v818 = vmul.f32 %v802, %v19
  %v819 = vmul.f32 %v803, %v19
  %v820 = vmul.f32 %v804, %v19
  %v821 = vmul.f32 %v805, %v19
  %v822 = vmul.f32 %v806, %v19
  %v823 = vmul.f32 %v807, %v19
  %v824 = vmul.f32 %v808, %v19
  %v825 = vmul.f32 %v809, %v19
  %v826 = vmul.f32 %v810, %v19
  %v827 = vmul.f32 %v811, %v19
  %v828 = vmul.f32 %v812, %v19
  %v829 = vmul.f32 %v813, %v19
  %v830 = vmul.f32 %v814, %v19
  %v831 = vmul.f32 %v815, %v19
  %v832 = vmul.f32 %v816, %v19
  %v833 = vadd.f32 %v817, %v26
  %v834 = vadd.f32 %v818, %v26
  %v835 = vadd.f32 %v819, %v26
  %v836 = vadd.f32 %v820, %v26
  %v837 = vadd.f32 %v821, %v26
  %v838 = vadd.f32 %v822, %v26
  %v839 = vadd.f32 %v823, %v26
  %v840 = vadd.f32 %v824, %v26
  %v841 = vadd.f32 %v825, %v26
  %v842 = vadd.f32 %v826, %v26
  %v843 = vadd.f32 %v827, %v26
  %v844 = vadd.f32 %v828, %v26
  %v845 = vadd.f32 %v829, %v26
  %v846 = vadd.f32 %v830, %v26
  %v847 = vadd.f32 %v831, %v26
  %v848 = vadd.f32 %v832, %v26
  %v849 = vmul.f32 %v687, 0.5
  %v850 = vmul.f32 %v688, 0.5
  %v851 = vmul.f32 %v689, 0.5
  %v852 = vmul.f32 %v690, 0.5
  %v853 = vmul.f32 %v691, 0.5
  %v854 = vmul.f32 %v692, 0.5
  %v855 = vmul.f32 %v693, 0.5
  %v856 = vmul.f32 %v694, 0.5
  %v857 = vmul.f32 %v695, 0.5
  %v858 = vmul.f32 %v696, 0.5
  %v859 = vmul.f32 %v697, 0.5
  %v860 = vmul.f32 %v698, 0.5
  %v861 = vmul.f32 %v699, 0.5
  %v862 = vmul.f32 %v700, 0.5
  %v863 = vmul.f32 %v701, 0.5
  %v864 = vmul.f32 %v702, 0.5
  %v865 = vadd.f32 %v849, %v833
  %v866 = vadd.f32 %v850, %v834
  %v867 = vadd.f32 %v851, %v835
  %v868 = vadd.f32 %v852, %v836
  %v869 = vadd.f32 %v853, %v837
  %v870 = vadd.f32 %v854, %v838
  %v871 = vadd.f32 %v855, %v839
  %v872 = vadd.f32 %v856, %v840
  %v873 = vadd.f32 %v857, %v841
  %v874 = vadd.f32 %v858, %v842
  %v875 = vadd.f32 %v859, %v843
  %v876 = vadd.f32 %v860, %v844
  %v877 = vadd.f32 %v861, %v845
  %v878 = vadd.f32 %v862, %v846
  %v879 = vadd.f32 %v863, %v847
  %v880 = vadd.f32 %v864, %v848
  %vm881 = vcmp.gt.f32.partialorder %v865, 1.0
  %vm882 = vcmp.gt.f32.partialorder %v866, 1.0
  %vm883 = vcmp.gt.f32.partialorder %v867, 1.0
  %vm884 = vcmp.gt.f32.partialorder %v868, 1.0
  %vm885 = vcmp.gt.f32.partialorder %v869, 1.0
  %vm886 = vcmp.gt.f32.partialorder %v870, 1.0
  %vm887 = vcmp.gt.f32.partialorder %v871, 1.0
  %vm888 = vcmp.gt.f32.partialorder %v872, 1.0
  %vm889 = vcmp.gt.f32.partialorder %v873, 1.0
  %vm890 = vcmp.gt.f32.partialorder %v874, 1.0
  %vm891 = vcmp.gt.f32.partialorder %v875, 1.0
  %vm892 = vcmp.gt.f32.partialorder %v876, 1.0
  %vm893 = vcmp.gt.f32.partialorder %v877, 1.0
  %vm894 = vcmp.gt.f32.partialorder %v878, 1.0
  %vm895 = vcmp.gt.f32.partialorder %v879, 1.0
  %vm896 = vcmp.gt.f32.partialorder %v880, 1.0
  %v897 = vsel %vm881, 1, 0
  %v898 = vsel %vm882, 1, 0
  %v899 = vsel %vm883, 1, 0
  %v900 = vsel %vm884, 1, 0
  %v901 = vsel %vm885, 1, 0
  %v902 = vsel %vm886, 1, 0
  %v903 = vsel %vm887, 1, 0
  %v904 = vsel %vm888, 1, 0
  %v905 = vsel %vm889, 1, 0
  %v906 = vsel %vm890, 1, 0
  %v907 = vsel %vm891, 1, 0
  %v908 = vsel %vm892, 1, 0
  %v909 = vsel %vm893, 1, 0
  %v910 = vsel %vm894, 1, 0
  %v911 = vsel %vm895, 1, 0
  %v912 = vsel %vm896, 1, 0
  %v913 = vcvt.s32.f32 %v897
  %v914 = vcvt.s32.f32 %v898
  %v915 = vcvt.s32.f32 %v899
  %v916 = vcvt.s32.f32 %v900
  %v917 = vcvt.s32.f32 %v901
  %v918 = vcvt.s32.f32 %v902
  %v919 = vcvt.s32.f32 %v903
  %v920 = vcvt.s32.f32 %v904
  %v921 = vcvt.s32.f32 %v905
  %v922 = vcvt.s32.f32 %v906
  %v923 = vcvt.s32.f32 %v907
  %v924 = vcvt.s32.f32 %v908
  %v925 = vcvt.s32.f32 %v909
  %v926 = vcvt.s32.f32 %v910
  %v927 = vcvt.s32.f32 %v911
  %v928 = vcvt.s32.f32 %v912
  %v929 = vpack.c.bf16 %v914, %v913
  %v930 = vpack.c.bf16 %v916, %v915
  %v931 = vpack.c.bf16 %v918, %v917
  %v932 = vpack.c.bf16 %v920, %v919
  %v933 = vpack.c.bf16 %v922, %v921
  %v934 = vpack.c.bf16 %v924, %v923
  %v935 = vpack.c.bf16 %v926, %v925
  %v936 = vpack.c.bf16 %v928, %v927
  %v945 = vunpack.c.l.b16 %v929
  %v946 = vunpack.c.h.b16 %v929
  %v947 = vunpack.c.l.b16 %v930
  %v948 = vunpack.c.h.b16 %v930
  %v949 = vunpack.c.l.b16 %v931
  %v950 = vunpack.c.h.b16 %v931
  %v951 = vunpack.c.l.b16 %v932
  %v952 = vunpack.c.h.b16 %v932
  %v953 = vunpack.c.l.b16 %v933
  %v954 = vunpack.c.h.b16 %v933
  %v955 = vunpack.c.l.b16 %v934
  %v956 = vunpack.c.h.b16 %v934
  %v957 = vunpack.c.l.b16 %v935
  %v958 = vunpack.c.h.b16 %v935
  %v959 = vunpack.c.l.b16 %v936
  %v960 = vunpack.c.h.b16 %v936
  %v961 = vpack.c.b16 %v945, %v945
  %v962 = vpack.c.b16 %v946, %v946
  %v963 = vpack.c.b16 %v947, %v947
  %v964 = vpack.c.b16 %v948, %v948
  %v965 = vpack.c.b16 %v949, %v949
  %v966 = vpack.c.b16 %v950, %v950
  %v967 = vpack.c.b16 %v951, %v951
  %v968 = vpack.c.b16 %v952, %v952
  %v969 = vpack.c.b16 %v953, %v953
  %v970 = vpack.c.b16 %v954, %v954
  %v971 = vpack.c.b16 %v955, %v955
  %v972 = vpack.c.b16 %v956, %v956
  %v973 = vpack.c.b16 %v957, %v957
  %v974 = vpack.c.b16 %v958, %v958
  %v975 = vpack.c.b16 %v959, %v959
  %v976 = vpack.c.b16 %v960, %v960
  %s993 = scalar_lea.vmem %s3, 192
  %994 = vst [vmem:[%s993] sm:$0xf] %v961
  %995 = vst [vmem:[%s993 + $0x4] sm:$0xf] %v962
  %996 = vst [vmem:[%s993 + $0x8] sm:$0xf] %v963
  %997 = vst [vmem:[%s993 + $0xc] sm:$0xf] %v964
  %998 = vst [vmem:[%s993 + $0x10] sm:$0xf] %v965
  %999 = vst [vmem:[%s993 + $0x14] sm:$0xf] %v966
  %1000 = vst [vmem:[%s993 + $0x18] sm:$0xf] %v967
  %1001 = vst [vmem:[%s993 + $0x1c] sm:$0xf] %v968
  %1002 = vst [vmem:[%s993 + $0x20] sm:$0xf] %v969
  %1003 = vst [vmem:[%s993 + $0x24] sm:$0xf] %v970
  %1004 = vst [vmem:[%s993 + $0x28] sm:$0xf] %v971
  %1005 = vst [vmem:[%s993 + $0x2c] sm:$0xf] %v972
  %1006 = vst [vmem:[%s993 + $0x30] sm:$0xf] %v973
  %1007 = vst [vmem:[%s993 + $0x34] sm:$0xf] %v974
  %1008 = vst [vmem:[%s993 + $0x38] sm:$0xf] %v975
  %1009 = vst [vmem:[%s993 + $0x3c] sm:$0xf] %v976
  // Predicated region
  $region14: #{conv3d_snn_forward.3} parent=0 // pred_check
    _
  $region15: #{conv3d_snn_forward.3} parent=0 // pred_check_branch
    %1011 = sbr.rel (0) target = $region17
  $region16: #{conv3d_snn_forward.3} parent=0 // pred_region
    _
  $region17: #{conv3d_snn_forward.3} parent=0 // pred_fallthru
    _
  // Predicated region
  $region18: #{conv3d_snn_forward.3} parent=0 // pred_check
    _
  $region19: #{conv3d_snn_forward.3} parent=0 // pred_check_branch
    %1013 = sbr.rel (0) target = $region21
  $region20: #{conv3d_snn_forward.3} parent=0 // pred_region
    _
  $region21: #{conv3d_snn_forward.3} parent=0 // pred_fallthru
    _

// kernel: conv3d_snn_forward.2
$region0: #{conv3d_snn_forward.2}
  #allocation0 [shape = 'u32[]', space=smem, size = 0x4, offset = 0x4, fixed_abs, tag = 'smem constant byte address 0x4 - core index']
  #allocation1 [shape = 'u32[144,128]{1,0:T(1,128)}', space=vmem, size = 0x12000, scoped, tag = 'internal scratch']
  %s0 = inlined_call_operand.vmem [shape: f32[2,6,10,10,4], index: 0, kind: input, shape index: {}]
  %s1 = inlined_call_operand.vmem [shape: bf16[128,128], index: 1, kind: input, shape index: {}]
  %s2 = inlined_call_operand.vmem [shape: bf16[4,2,64,128], index: 2, kind: output, shape index: {0}]
  %s3 = inlined_call_operand.vmem [shape: f32[2,4,2,128], index: 3, kind: output, shape index: {1}]
  %4 = xla_tuple %s2, %s3
  %s5 = sld [smem:[#allocation0]]
  $region49: #{conv3d_snn_forward.2} parent=0
    _
  %s7 = ssub.s32 1, %s5
  %s8 = scalar_select 0, %s7, %s5
  loop: start=0, step=1, limit=10
  $region2: #{conv3d_snn_forward.2} parent=0 // loop_pre_header
    _
  $region3: #{conv3d_snn_forward.2} parent=0 // loop_header
    %s10 = sphi 0, %s14
    %p11 = scmp.ge.s32.totalorder %s10, 10
    %s17 = sphi 0, %s29
    %s18 = sphi 0, %s25
    %s19 = sphi 0, %s17
    %s20 = sphi 0, %s18
    %s21 = sphi 0, %s19
    %s22 = sphi 0, %s20
    %s32 = sphi 0, %s34
    %s35 = sphi 0, %s32
    %s36 = sphi 0, %s35
    %s52 = sphi 0, %s36
    %s56 = sphi 0, %s56
    %s58 = sphi 0, %s56
    %s59 = sphi 0, %s58
    %s73 = sphi 0, %s59
    %s81 = sphi 0, %s83
    %s84 = sphi 0, %s81
    %s85 = sphi 0, %s84
    %s101 = sphi 0, %s85
    %s109 = sphi 0, %s111
    %s112 = sphi 0, %s109
    %s113 = sphi 0, %s112
    %s129 = sphi 0, %s113
  $region4: #{conv3d_snn_forward.2} parent=0 // loop_header_branch
    %13 = sbr.rel (%p11) target = $region8
  $region5: #{conv3d_snn_forward.2} parent=0 // loop_body
    %s15 = ssub.s32 %s10, 1
    %s16 = ssub.s32 %s10, 2
    %s23 = sadd.s32 1, %s18
    %p24 = scmp.ge.s32.totalorder %s23, 4
    %s25 = scalar_select %p24, 0, %s23
    %s26 = sadd.s32 1, %s17
    %s27 = scalar_select %p24, %s26, %s17
    %p28 = scmp.ge.s32.totalorder %s27, 2
    %s29 = scalar_select %p28, 0, %s27
    %s30 = ssub.s32 %s17, %s29
    %p31 = scmp.eq.s32.totalorder %s30, 0
    %s33 = sadd.s32 %s32, 1
    %s34 = scalar_select %p31, %s32, %s33
    %p37 = pneg %p31
    %p38 = scmp.eq.s32.totalorder %s10, 7
    %p39 = por %p37, %p38
    %p40 = scmp.ne.s32.totalorder %s32, %s35
    %p41 = scmp.eq.s32.totalorder %s10, 0
    %p42 = por %p40, %p41
    %p43 = scmp.ne.s32.totalorder %s32, %s35
    %p44 = scmp.eq.s32.totalorder %s15, 7
    %p45 = por %p43, %p44
    %p46 = scmp.ne.s32.totalorder %s35, %s36
    %p47 = scmp.eq.s32.totalorder %s15, 0
    %p48 = por %p46, %p47
    %p49 = scmp.ne.s32.totalorder %s35, %s36
    %p50 = scmp.eq.s32.totalorder %s16, 7
    %p51 = por %p49, %p50
    %p53 = scmp.ne.s32.totalorder %s36, %s52
    %p54 = scmp.eq.s32.totalorder %s16, 0
    %p55 = por %p53, %p54
    %s57 = sadd.s32 %s56, 1
    %p60 = scmp.eq.s32.totalorder %s10, 7
    %p61 = scmp.ne.s32.totalorder %s56, %s58
    %p62 = scmp.eq.s32.totalorder %s10, 0
    %p63 = por %p61, %p62
    %p64 = scmp.ne.s32.totalorder %s56, %s58
    %p65 = scmp.eq.s32.totalorder %s15, 7
    %p66 = por %p64, %p65
    %p67 = scmp.ne.s32.totalorder %s58, %s59
    %p68 = scmp.eq.s32.totalorder %s15, 0
    %p69 = por %p67, %p68
    %p70 = scmp.ne.s32.totalorder %s58, %s59
    %p71 = scmp.eq.s32.totalorder %s16, 7
    %p72 = por %p70, %p71
    %p74 = scmp.ne.s32.totalorder %s59, %s73
    %p75 = scmp.eq.s32.totalorder %s16, 0
    %p76 = por %p74, %p75
    %s77 = ssub.s32 %s18, %s25
    %s78 = ssub.s32 %s17, %s29
    %s79 = sor.u32 %s77, %s78
    %p80 = scmp.eq.s32.totalorder %s79, 0
    %s82 = sadd.s32 %s81, 1
    %s83 = scalar_select %p80, %s81, %s82
    %p86 = pneg %p80
    %p87 = scmp.eq.s32.totalorder %s10, 7
    %p88 = por %p86, %p87
    %p89 = scmp.ne.s32.totalorder %s81, %s84
    %p90 = scmp.eq.s32.totalorder %s10, 0
    %p91 = por %p89, %p90
    %p92 = scmp.ne.s32.totalorder %s81, %s84
    %p93 = scmp.eq.s32.totalorder %s15, 7
    %p94 = por %p92, %p93
    %p95 = scmp.ne.s32.totalorder %s84, %s85
    %p96 = scmp.eq.s32.totalorder %s15, 0
    %p97 = por %p95, %p96
    %p98 = scmp.ne.s32.totalorder %s84, %s85
    %p99 = scmp.eq.s32.totalorder %s16, 7
    %p100 = por %p98, %p99
    %p102 = scmp.ne.s32.totalorder %s85, %s101
    %p103 = scmp.eq.s32.totalorder %s16, 0
    %p104 = por %p102, %p103
    %s105 = ssub.s32 %s17, %s29
    %s106 = ssub.s32 %s18, %s25
    %s107 = sor.u32 %s105, %s106
    %p108 = scmp.eq.s32.totalorder %s107, 0
    %s110 = sadd.s32 %s109, 1
    %s111 = scalar_select %p108, %s109, %s110
    %p114 = pneg %p108
    %p115 = scmp.eq.s32.totalorder %s10, 7
    %p116 = por %p114, %p115
    %p117 = scmp.ne.s32.totalorder %s109, %s112
    %p118 = scmp.eq.s32.totalorder %s10, 0
    %p119 = por %p117, %p118
    %p120 = scmp.ne.s32.totalorder %s109, %s112
    %p121 = scmp.eq.s32.totalorder %s15, 7
    %p122 = por %p120, %p121
    %p123 = scmp.ne.s32.totalorder %s112, %s113
    %p124 = scmp.eq.s32.totalorder %s15, 0
    %p125 = por %p123, %p124
    %p126 = scmp.ne.s32.totalorder %s112, %s113
    %p127 = scmp.eq.s32.totalorder %s16, 7
    %p128 = por %p126, %p127
    %p130 = scmp.ne.s32.totalorder %s113, %s129
    %p131 = scmp.eq.s32.totalorder %s16, 0
    %p132 = por %p130, %p131
    %p133 = scmp.le.s32.totalorder 1, %s10
    %p134 = scmp.lt.s32.totalorder %s10, 9
    %p135 = pnand %p133, %p134
    %p136 = pneg %p135
    // Predicated region
    $region9: #{conv3d_snn_forward.2} parent=5 // pred_check
      _
    $region10: #{conv3d_snn_forward.2} parent=5 // pred_check_branch
      %138 = sbr.rel (%p135) target = $region12
    $region11: #{conv3d_snn_forward.2} parent=5 // pred_region
      %s139 = ssub.s32 %s10, 1
      // Predicated region
      $region13: #{conv3d_snn_forward.2} parent=11 // pred_check
        %p140 = pneg %p69
      $region14: #{conv3d_snn_forward.2} parent=11 // pred_check_branch
        %142 = sbr.rel (%p140) target = $region16
      $region15: #{conv3d_snn_forward.2} parent=11 // pred_region
        _
      $region16: #{conv3d_snn_forward.2} parent=11 // pred_fallthru
        _
    $region12: #{conv3d_snn_forward.2} parent=5 // pred_fallthru
      _
    %p143 = scmp.lt.s32.totalorder %s10, 8
    // Predicated region
    $region17: #{conv3d_snn_forward.2} parent=5 // pred_check
      %p144 = pneg %p143
    $region18: #{conv3d_snn_forward.2} parent=5 // pred_check_branch
      %146 = sbr.rel (%p144) target = $region20
    $region19: #{conv3d_snn_forward.2} parent=5 // pred_region
      // Predicated region
      $region21: #{conv3d_snn_forward.2} parent=19 // pred_check
        %p147 = pneg %p42
      $region22: #{conv3d_snn_forward.2} parent=19 // pred_check_branch
        %149 = sbr.rel (%p147) target = $region24
      $region23: #{conv3d_snn_forward.2} parent=19 // pred_region
        %p150 = scmp.lt.s32.totalorder %s17, 1
        %s151 = scalar_select %p150, %s17, 1
        %s152 = smul.addr %s151, 120
        %s153 = smul.addr %s152, 8
        %s154 = scalar_lea.vmem %s0, %s153
      $region24: #{conv3d_snn_forward.2} parent=19 // pred_fallthru
        _
    $region20: #{conv3d_snn_forward.2} parent=5 // pred_fallthru
      _
    %p155 = scmp.le.s32.totalorder 1, %s10
    %p156 = scmp.lt.s32.totalorder %s10, 9
    %p157 = pnand %p155, %p156
    %p158 = pneg %p157
    // Predicated region
    $region25: #{conv3d_snn_forward.2} parent=5 // pred_check
      _
    $region26: #{conv3d_snn_forward.2} parent=5 // pred_check_branch
      %160 = sbr.rel (%p157) target = $region28
    $region27: #{conv3d_snn_forward.2} parent=5 // pred_region
      %s161 = ssub.s32 %s10, 1
      %p162 = scmp.lt.s32.totalorder %s19, 1
      %s163 = scalar_select %p162, %s19, 1
      %s164 = smul.addr %s163, 120
      %s165 = smul.addr %s164, 8
      %s166 = scalar_lea.vmem %s0, %s165
      %p167 = pneg %p48
      %p168 = pneg %p45
      %p169 = pneg %p69
      %p170 = pneg %p66
      %p171 = pneg %p97
      %p172 = pneg %p94
      %p173 = scmp.lt.s32.totalorder %s20, 3
      %s174 = scalar_select %p173, %s20, 3
      %p175 = scmp.lt.s32.totalorder %s19, 1
      %s176 = scalar_select %p175, %s19, 1
      %s177 = smul.addr %s176, 8
      %s178 = smul.addr %s174, 16
      %s179 = sadd.s32 %s177, %s178
      %s180 = smul.addr %s179, 4
      %s181 = scalar_lea.vmem %s2, %s180
      %p182 = pneg %p125
      %p183 = pneg %p122
      %p184 = scmp.lt.s32.totalorder %s19, 1
      %s185 = scalar_select %p184, %s19, 1
      %p186 = scmp.lt.s32.totalorder %s20, 3
      %s187 = scalar_select %p186, %s20, 3
      %s188 = smul.addr %s185, 4
      %s189 = sadd.s32 %s187, %s188
      %s190 = smul.addr %s189, 2
      %s191 = scalar_lea.vmem %s3, %s190
      %p192 = scmp.lt.s32.totalorder %s19, 1
      %s193 = scalar_select %p192, %s19, 1
      %s194 = smul.addr %s193, 120
      %s195 = smul.addr %s194, 8
      %s196 = scalar_lea.vmem %s0, %s195
      %p197 = scmp.lt.s32.totalorder %s20, 3
      %s198 = scalar_select %p197, %s20, 3
      %p199 = scmp.lt.s32.totalorder %s19, 1
      %s200 = scalar_select %p199, %s19, 1
      %s201 = smul.addr %s200, 8
      %s202 = smul.addr %s198, 16
      %s203 = sadd.s32 %s201, %s202
      %s204 = smul.addr %s203, 4
      %s205 = scalar_lea.vmem %s2, %s204
      %p206 = scmp.lt.s32.totalorder %s19, 1
      %s207 = scalar_select %p206, %s19, 1
      %p208 = scmp.lt.s32.totalorder %s20, 3
      %s209 = scalar_select %p208, %s20, 3
      %s210 = smul.addr %s207, 4
      %s211 = sadd.s32 %s209, %s210
      %s212 = smul.addr %s211, 2
      %s213 = scalar_lea.vmem %s3, %s212
      %s215 = smul.u32 %s20, 160
      %s216 = scalar_lea.vmem %s196, %s215
      %v217 = vld [vmem:[%s216] sm:$0xff]
      %v218 = vld [vmem:[%s216 + $0x8] sm:$0x3]
      %v219 = vld [vmem:[%s216 + $0x10] sm:$0xff]
      %v220 = vld [vmem:[%s216 + $0x18] sm:$0x3]
      %v221 = vld [vmem:[%s216 + $0x20] sm:$0xff]
      %v222 = vld [vmem:[%s216 + $0x28] sm:$0x3]
      %v223 = vld [vmem:[%s216 + $0x30] sm:$0xff]
      %v224 = vld [vmem:[%s216 + $0x38] sm:$0x3]
      %v225 = vld [vmem:[%s216 + $0x40] sm:$0xff]
      %v226 = vld [vmem:[%s216 + $0x48] sm:$0x3]
      %v227 = vld [vmem:[%s216 + $0x50] sm:$0xff]
      %v228 = vld [vmem:[%s216 + $0x58] sm:$0x3]
      %v229 = vld [vmem:[%s216 + $0x60] sm:$0xff]
      %v230 = vld [vmem:[%s216 + $0x68] sm:$0x3]
      %v231 = vld [vmem:[%s216 + $0x70] sm:$0xff]
      %v232 = vld [vmem:[%s216 + $0x78] sm:$0x3]
      %v233 = vld [vmem:[%s216 + $0x80] sm:$0xff]
      %v234 = vld [vmem:[%s216 + $0x88] sm:$0x3]
      %v235 = vld [vmem:[%s216 + $0x90] sm:$0xff]
      %v236 = vld [vmem:[%s216 + $0x98] sm:$0x3]
      %s237 = sadd.s32 %s20, 1
      %s238 = smul.u32 %s237, 160
      %s239 = scalar_lea.vmem %s196, %s238
      %v240 = vld [vmem:[%s239] sm:$0xff]
      %v241 = vld [vmem:[%s239 + $0x8] sm:$0x3]
      %v242 = vld [vmem:[%s239 + $0x10] sm:$0xff]
      %v243 = vld [vmem:[%s239 + $0x18] sm:$0x3]
      %v244 = vld [vmem:[%s239 + $0x20] sm:$0xff]
      %v245 = vld [vmem:[%s239 + $0x28] sm:$0x3]
      %v246 = vld [vmem:[%s239 + $0x30] sm:$0xff]
      %v247 = vld [vmem:[%s239 + $0x38] sm:$0x3]
      %v248 = vld [vmem:[%s239 + $0x40] sm:$0xff]
      %v249 = vld [vmem:[%s239 + $0x48] sm:$0x3]
      %v250 = vld [vmem:[%s239 + $0x50] sm:$0xff]
      %v251 = vld [vmem:[%s239 + $0x58] sm:$0x3]
      %v252 = vld [vmem:[%s239 + $0x60] sm:$0xff]
      %v253 = vld [vmem:[%s239 + $0x68] sm:$0x3]
      %v254 = vld [vmem:[%s239 + $0x70] sm:$0xff]
      %v255 = vld [vmem:[%s239 + $0x78] sm:$0x3]
      %v256 = vld [vmem:[%s239 + $0x80] sm:$0xff]
      %v257 = vld [vmem:[%s239 + $0x88] sm:$0x3]
      %v258 = vld [vmem:[%s239 + $0x90] sm:$0xff]
      %v259 = vld [vmem:[%s239 + $0x98] sm:$0x3]
      %s260 = sadd.s32 %s20, 2
      %s261 = smul.u32 %s260, 160
      %s262 = scalar_lea.vmem %s196, %s261
      %v263 = vld [vmem:[%s262] sm:$0xff]
      %v264 = vld [vmem:[%s262 + $0x8] sm:$0x3]
      %v265 = vld [vmem:[%s262 + $0x10] sm:$0xff]
      %v266 = vld [vmem:[%s262 + $0x18] sm:$0x3]
      %v267 = vld [vmem:[%s262 + $0x20] sm:$0xff]
      %v268 = vld [vmem:[%s262 + $0x28] sm:$0x3]
      %v269 = vld [vmem:[%s262 + $0x30] sm:$0xff]
      %v270 = vld [vmem:[%s262 + $0x38] sm:$0x3]
      %v271 = vld [vmem:[%s262 + $0x40] sm:$0xff]
      %v272 = vld [vmem:[%s262 + $0x48] sm:$0x3]
      %v273 = vld [vmem:[%s262 + $0x50] sm:$0xff]
      %v274 = vld [vmem:[%s262 + $0x58] sm:$0x3]
      %v275 = vld [vmem:[%s262 + $0x60] sm:$0xff]
      %v276 = vld [vmem:[%s262 + $0x68] sm:$0x3]
      %v277 = vld [vmem:[%s262 + $0x70] sm:$0xff]
      %v278 = vld [vmem:[%s262 + $0x78] sm:$0x3]
      %v279 = vld [vmem:[%s262 + $0x80] sm:$0xff]
      %v280 = vld [vmem:[%s262 + $0x88] sm:$0x3]
      %v281 = vld [vmem:[%s262 + $0x90] sm:$0xff]
      %v282 = vld [vmem:[%s262 + $0x98] sm:$0x3]
      %vm299 = vcmask 1046528
      %v300 = vrot.slane %v217, 1
      %v301 = vrot.slane %v218, 1
      %v302 = vsel %vm299, %v300, %v301
      %v303 = vrot.slane %v219, 1
      %v304 = vrot.slane %v220, 1
      %v305 = vsel %vm299, %v303, %v304
      %v306 = vrot.slane %v221, 1
      %v307 = vrot.slane %v222, 1
      %v308 = vsel %vm299, %v306, %v307
      %v309 = vrot.slane %v223, 1
      %v310 = vrot.slane %v224, 1
      %v311 = vsel %vm299, %v309, %v310
      %v312 = vrot.slane %v225, 1
      %v313 = vrot.slane %v226, 1
      %v314 = vsel %vm299, %v312, %v313
      %v315 = vrot.slane %v227, 1
      %v316 = vrot.slane %v228, 1
      %v317 = vsel %vm299, %v315, %v316
      %v318 = vrot.slane %v229, 1
      %v319 = vrot.slane %v230, 1
      %v320 = vsel %vm299, %v318, %v319
      %v321 = vrot.slane %v231, 1
      %v322 = vrot.slane %v232, 1
      %v323 = vsel %vm299, %v321, %v322
      %324 = vrot.lane.b32.xlu0 %v302, 4
      %v325 = vpop.permute.xlu0 %324
      %326 = vrot.lane.b32.xlu0 %v305, 4
      %v327 = vpop.permute.xlu0 %326
      %328 = vrot.lane.b32.xlu0 %v308, 4
      %v329 = vpop.permute.xlu0 %328
      %330 = vrot.lane.b32.xlu0 %v311, 4
      %v331 = vpop.permute.xlu0 %330
      %332 = vrot.lane.b32.xlu0 %v314, 4
      %v333 = vpop.permute.xlu0 %332
      %334 = vrot.lane.b32.xlu0 %v317, 4
      %v335 = vpop.permute.xlu0 %334
      %336 = vrot.lane.b32.xlu0 %v320, 4
      %v337 = vpop.permute.xlu0 %336
      %338 = vrot.lane.b32.xlu0 %v323, 4
      %v339 = vpop.permute.xlu0 %338
      %vm348 = vcmask 1045504
      %v349 = vrot.slane %v217, 2
      %v350 = vrot.slane %v218, 2
      %v351 = vsel %vm348, %v349, %v350
      %v352 = vrot.slane %v219, 2
      %v353 = vrot.slane %v220, 2
      %v354 = vsel %vm348, %v352, %v353
      %v355 = vrot.slane %v221, 2
      %v356 = vrot.slane %v222, 2
      %v357 = vsel %vm348, %v355, %v356
      %v358 = vrot.slane %v223, 2
      %v359 = vrot.slane %v224, 2
      %v360 = vsel %vm348, %v358, %v359
      %v361 = vrot.slane %v225, 2
      %v362 = vrot.slane %v226, 2
      %v363 = vsel %vm348, %v361, %v362
      %v364 = vrot.slane %v227, 2
      %v365 = vrot.slane %v228, 2
      %v366 = vsel %vm348, %v364, %v365
      %v367 = vrot.slane %v229, 2
      %v368 = vrot.slane %v230, 2
      %v369 = vsel %vm348, %v367, %v368
      %v370 = vrot.slane %v231, 2
      %v371 = vrot.slane %v232, 2
      %v372 = vsel %vm348, %v370, %v371
      %373 = vrot.lane.b32.xlu0 %v351, 8
      %v374 = vpop.permute.xlu0 %373
      %375 = vrot.lane.b32.xlu0 %v354, 8
      %v376 = vpop.permute.xlu0 %375
      %377 = vrot.lane.b32.xlu0 %v357, 8
      %v378 = vpop.permute.xlu0 %377
      %379 = vrot.lane.b32.xlu0 %v360, 8
      %v380 = vpop.permute.xlu0 %379
      %381 = vrot.lane.b32.xlu0 %v363, 8
      %v382 = vpop.permute.xlu0 %381
      %383 = vrot.lane.b32.xlu0 %v366, 8
      %v384 = vpop.permute.xlu0 %383
      %385 = vrot.lane.b32.xlu0 %v369, 8
      %v386 = vpop.permute.xlu0 %385
      %387 = vrot.lane.b32.xlu0 %v372, 8
      %v388 = vpop.permute.xlu0 %387
      %398 = vrot.lane.b32.xlu0 %v219, 12
      %v399 = vpop.permute.xlu0 %398
      %400 = vrot.lane.b32.xlu0 %v221, 12
      %v401 = vpop.permute.xlu0 %400
      %402 = vrot.lane.b32.xlu0 %v223, 12
      %v403 = vpop.permute.xlu0 %402
      %404 = vrot.lane.b32.xlu0 %v225, 12
      %v405 = vpop.permute.xlu0 %404
      %406 = vrot.lane.b32.xlu0 %v227, 12
      %v407 = vpop.permute.xlu0 %406
      %408 = vrot.lane.b32.xlu0 %v229, 12
      %v409 = vpop.permute.xlu0 %408
      %410 = vrot.lane.b32.xlu0 %v231, 12
      %v411 = vpop.permute.xlu0 %410
      %412 = vrot.lane.b32.xlu0 %v233, 12
      %v413 = vpop.permute.xlu0 %412
      %v423 = vrot.slane %v233, 1
      %v424 = vrot.slane %v234, 1
      %v425 = vsel %vm299, %v423, %v424
      %426 = vrot.lane.b32.xlu0 %v305, 16
      %v427 = vpop.permute.xlu0 %426
      %428 = vrot.lane.b32.xlu0 %v308, 16
      %v429 = vpop.permute.xlu0 %428
      %430 = vrot.lane.b32.xlu0 %v311, 16
      %v431 = vpop.permute.xlu0 %430
      %432 = vrot.lane.b32.xlu0 %v314, 16
      %v433 = vpop.permute.xlu0 %432
      %434 = vrot.lane.b32.xlu0 %v317, 16
      %v435 = vpop.permute.xlu0 %434
      %436 = vrot.lane.b32.xlu0 %v320, 16
      %v437 = vpop.permute.xlu0 %436
      %438 = vrot.lane.b32.xlu0 %v323, 16
      %v439 = vpop.permute.xlu0 %438
      %440 = vrot.lane.b32.xlu0 %v425, 16
      %v441 = vpop.permute.xlu0 %440
      %v450 = vrot.slane %v233, 2
      %v451 = vrot.slane %v234, 2
      %v452 = vsel %vm348, %v450, %v451
      %453 = vrot.lane.b32.xlu0 %v354, 20
      %v454 = vpop.permute.xlu0 %453
      %455 = vrot.lane.b32.xlu0 %v357, 20
      %v456 = vpop.permute.xlu0 %455
      %457 = vrot.lane.b32.xlu0 %v360, 20
      %v458 = vpop.permute.xlu0 %457
      %459 = vrot.lane.b32.xlu0 %v363, 20
      %v460 = vpop.permute.xlu0 %459
      %461 = vrot.lane.b32.xlu0 %v366, 20
      %v462 = vpop.permute.xlu0 %461
      %463 = vrot.lane.b32.xlu0 %v369, 20
      %v464 = vpop.permute.xlu0 %463
      %465 = vrot.lane.b32.xlu0 %v372, 20
      %v466 = vpop.permute.xlu0 %465
      %467 = vrot.lane.b32.xlu0 %v452, 20
      %v468 = vpop.permute.xlu0 %467
      %478 = vrot.lane.b32.xlu0 %v221, 24
      %v479 = vpop.permute.xlu0 %478
      %480 = vrot.lane.b32.xlu0 %v223, 24
      %v481 = vpop.permute.xlu0 %480
      %482 = vrot.lane.b32.xlu0 %v225, 24
      %v483 = vpop.permute.xlu0 %482
      %484 = vrot.lane.b32.xlu0 %v227, 24
      %v485 = vpop.permute.xlu0 %484
      %486 = vrot.lane.b32.xlu0 %v229, 24
      %v487 = vpop.permute.xlu0 %486
      %488 = vrot.lane.b32.xlu0 %v231, 24
      %v489 = vpop.permute.xlu0 %488
      %490 = vrot.lane.b32.xlu0 %v233, 24
      %v491 = vpop.permute.xlu0 %490
      %492 = vrot.lane.b32.xlu0 %v235, 24
      %v493 = vpop.permute.xlu0 %492
      %v503 = vrot.slane %v235, 1
      %v504 = vrot.slane %v236, 1
      %v505 = vsel %vm299, %v503, %v504
      %506 = vrot.lane.b32.xlu0 %v308, 28
      %v507 = vpop.permute.xlu0 %506
      %508 = vrot.lane.b32.xlu0 %v311, 28
      %v509 = vpop.permute.xlu0 %508
      %510 = vrot.lane.b32.xlu0 %v314, 28
      %v511 = vpop.permute.xlu0 %510
      %512 = vrot.lane.b32.xlu0 %v317, 28
      %v513 = vpop.permute.xlu0 %512
      %514 = vrot.lane.b32.xlu0 %v320, 28
      %v515 = vpop.permute.xlu0 %514
      %516 = vrot.lane.b32.xlu0 %v323, 28
      %v517 = vpop.permute.xlu0 %516
      %518 = vrot.lane.b32.xlu0 %v425, 28
      %v519 = vpop.permute.xlu0 %518
      %520 = vrot.lane.b32.xlu0 %v505, 28
      %v521 = vpop.permute.xlu0 %520
      %v530 = vrot.slane %v235, 2
      %v531 = vrot.slane %v236, 2
      %v532 = vsel %vm348, %v530, %v531
      %533 = vrot.lane.b32.xlu0 %v357, 32
      %v534 = vpop.permute.xlu0 %533
      %535 = vrot.lane.b32.xlu0 %v360, 32
      %v536 = vpop.permute.xlu0 %535
      %537 = vrot.lane.b32.xlu0 %v363, 32
      %v538 = vpop.permute.xlu0 %537
      %539 = vrot.lane.b32.xlu0 %v366, 32
      %v540 = vpop.permute.xlu0 %539
      %541 = vrot.lane.b32.xlu0 %v369, 32
      %v542 = vpop.permute.xlu0 %541
      %543 = vrot.lane.b32.xlu0 %v372, 32
      %v544 = vpop.permute.xlu0 %543
      %545 = vrot.lane.b32.xlu0 %v452, 32
      %v546 = vpop.permute.xlu0 %545
      %547 = vrot.lane.b32.xlu0 %v532, 32
      %v548 = vpop.permute.xlu0 %547
      %565 = vrot.lane.b32.xlu0 %v240, 36
      %v566 = vpop.permute.xlu0 %565
      %567 = vrot.lane.b32.xlu0 %v242, 36
      %v568 = vpop.permute.xlu0 %567
      %569 = vrot.lane.b32.xlu0 %v244, 36
      %v570 = vpop.permute.xlu0 %569
      %571 = vrot.lane.b32.xlu0 %v246, 36
      %v572 = vpop.permute.xlu0 %571
      %573 = vrot.lane.b32.xlu0 %v248, 36
      %v574 = vpop.permute.xlu0 %573
      %575 = vrot.lane.b32.xlu0 %v250, 36
      %v576 = vpop.permute.xlu0 %575
      %577 = vrot.lane.b32.xlu0 %v252, 36
      %v578 = vpop.permute.xlu0 %577
      %579 = vrot.lane.b32.xlu0 %v254, 36
      %v580 = vpop.permute.xlu0 %579
      %v597 = vrot.slane %v240, 1
      %v598 = vrot.slane %v241, 1
      %v599 = vsel %vm299, %v597, %v598
      %v600 = vrot.slane %v242, 1
      %v601 = vrot.slane %v243, 1
      %v602 = vsel %vm299, %v600, %v601
      %v603 = vrot.slane %v244, 1
      %v604 = vrot.slane %v245, 1
      %v605 = vsel %vm299, %v603, %v604
      %v606 = vrot.slane %v246, 1
      %v607 = vrot.slane %v247, 1
      %v608 = vsel %vm299, %v606, %v607
      %v609 = vrot.slane %v248, 1
      %v610 = vrot.slane %v249, 1
      %v611 = vsel %vm299, %v609, %v610
      %v612 = vrot.slane %v250, 1
      %v613 = vrot.slane %v251, 1
      %v614 = vsel %vm299, %v612, %v613
      %v615 = vrot.slane %v252, 1
      %v616 = vrot.slane %v253, 1
      %v617 = vsel %vm299, %v615, %v616
      %v618 = vrot.slane %v254, 1
      %v619 = vrot.slane %v255, 1
      %v620 = vsel %vm299, %v618, %v619
      %621 = vrot.lane.b32.xlu0 %v599, 40
      %v622 = vpop.permute.xlu0 %621
      %623 = vrot.lane.b32.xlu0 %v602, 40
      %v624 = vpop.permute.xlu0 %623
      %625 = vrot.lane.b32.xlu0 %v605, 40
      %v626 = vpop.permute.xlu0 %625
      %627 = vrot.lane.b32.xlu0 %v608, 40
      %v628 = vpop.permute.xlu0 %627
      %629 = vrot.lane.b32.xlu0 %v611, 40
      %v630 = vpop.permute.xlu0 %629
      %631 = vrot.lane.b32.xlu0 %v614, 40
      %v632 = vpop.permute.xlu0 %631
      %633 = vrot.lane.b32.xlu0 %v617, 40
      %v634 = vpop.permute.xlu0 %633
      %635 = vrot.lane.b32.xlu0 %v620, 40
      %v636 = vpop.permute.xlu0 %635
      %v645 = vrot.slane %v240, 2
      %v646 = vrot.slane %v241, 2
      %v647 = vsel %vm348, %v645, %v646
      %v648 = vrot.slane %v242, 2
      %v649 = vrot.slane %v243, 2
      %v650 = vsel %vm348, %v648, %v649
      %v651 = vrot.slane %v244, 2
      %v652 = vrot.slane %v245, 2
      %v653 = vsel %vm348, %v651, %v652
      %v654 = vrot.slane %v246, 2
      %v655 = vrot.slane %v247, 2
      %v656 = vsel %vm348, %v654, %v655
      %v657 = vrot.slane %v248, 2
      %v658 = vrot.slane %v249, 2
      %v659 = vsel %vm348, %v657, %v658
      %v660 = vrot.slane %v250, 2
      %v661 = vrot.slane %v251, 2
      %v662 = vsel %vm348, %v660, %v661
      %v663 = vrot.slane %v252, 2
      %v664 = vrot.slane %v253, 2
      %v665 = vsel %vm348, %v663, %v664
      %v666 = vrot.slane %v254, 2
      %v667 = vrot.slane %v255, 2
      %v668 = vsel %vm348, %v666, %v667
      %669 = vrot.lane.b32.xlu0 %v647, 44
      %v670 = vpop.permute.xlu0 %669
      %671 = vrot.lane.b32.xlu0 %v650, 44
      %v672 = vpop.permute.xlu0 %671
      %673 = vrot.lane.b32.xlu0 %v653, 44
      %v674 = vpop.permute.xlu0 %673
      %675 = vrot.lane.b32.xlu0 %v656, 44
      %v676 = vpop.permute.xlu0 %675
      %677 = vrot.lane.b32.xlu0 %v659, 44
      %v678 = vpop.permute.xlu0 %677
      %679 = vrot.lane.b32.xlu0 %v662, 44
      %v680 = vpop.permute.xlu0 %679
      %681 = vrot.lane.b32.xlu0 %v665, 44
      %v682 = vpop.permute.xlu0 %681
      %683 = vrot.lane.b32.xlu0 %v668, 44
      %v684 = vpop.permute.xlu0 %683
      %694 = vrot.lane.b32.xlu0 %v242, 48
      %v695 = vpop.permute.xlu0 %694
      %696 = vrot.lane.b32.xlu0 %v244, 48
      %v697 = vpop.permute.xlu0 %696
      %698 = vrot.lane.b32.xlu0 %v246, 48
      %v699 = vpop.permute.xlu0 %698
      %700 = vrot.lane.b32.xlu0 %v248, 48
      %v701 = vpop.permute.xlu0 %700
      %702 = vrot.lane.b32.xlu0 %v250, 48
      %v703 = vpop.permute.xlu0 %702
      %704 = vrot.lane.b32.xlu0 %v252, 48
      %v705 = vpop.permute.xlu0 %704
      %706 = vrot.lane.b32.xlu0 %v254, 48
      %v707 = vpop.permute.xlu0 %706
      %708 = vrot.lane.b32.xlu0 %v256, 48
      %v709 = vpop.permute.xlu0 %708
      %v719 = vrot.slane %v256, 1
      %v720 = vrot.slane %v257, 1
      %v721 = vsel %vm299, %v719, %v720
      %722 = vrot.lane.b32.xlu0 %v602, 52
      %v723 = vpop.permute.xlu0 %722
      %724 = vrot.lane.b32.xlu0 %v605, 52
      %v725 = vpop.permute.xlu0 %724
      %726 = vrot.lane.b32.xlu0 %v608, 52
      %v727 = vpop.permute.xlu0 %726
      %728 = vrot.lane.b32.xlu0 %v611, 52
      %v729 = vpop.permute.xlu0 %728
      %730 = vrot.lane.b32.xlu0 %v614, 52
      %v731 = vpop.permute.xlu0 %730
      %732 = vrot.lane.b32.xlu0 %v617, 52
      %v733 = vpop.permute.xlu0 %732
      %734 = vrot.lane.b32.xlu0 %v620, 52
      %v735 = vpop.permute.xlu0 %734
      %736 = vrot.lane.b32.xlu0 %v721, 52
      %v737 = vpop.permute.xlu0 %736
      %v746 = vrot.slane %v256, 2
      %v747 = vrot.slane %v257, 2
      %v748 = vsel %vm348, %v746, %v747
      %749 = vrot.lane.b32.xlu0 %v650, 56
      %v750 = vpop.permute.xlu0 %749
      %751 = vrot.lane.b32.xlu0 %v653, 56
      %v752 = vpop.permute.xlu0 %751
      %753 = vrot.lane.b32.xlu0 %v656, 56
      %v754 = vpop.permute.xlu0 %753
      %755 = vrot.lane.b32.xlu0 %v659, 56
      %v756 = vpop.permute.xlu0 %755
      %757 = vrot.lane.b32.xlu0 %v662, 56
      %v758 = vpop.permute.xlu0 %757
      %759 = vrot.lane.b32.xlu0 %v665, 56
      %v760 = vpop.permute.xlu0 %759
      %761 = vrot.lane.b32.xlu0 %v668, 56
      %v762 = vpop.permute.xlu0 %761
      %763 = vrot.lane.b32.xlu0 %v748, 56
      %v764 = vpop.permute.xlu0 %763
      %774 = vrot.lane.b32.xlu0 %v244, 60
      %v775 = vpop.permute.xlu0 %774
      %776 = vrot.lane.b32.xlu0 %v246, 60
      %v777 = vpop.permute.xlu0 %776
      %778 = vrot.lane.b32.xlu0 %v248, 60
      %v779 = vpop.permute.xlu0 %778
      %780 = vrot.lane.b32.xlu0 %v250, 60
      %v781 = vpop.permute.xlu0 %780
      %782 = vrot.lane.b32.xlu0 %v252, 60
      %v783 = vpop.permute.xlu0 %782
      %784 = vrot.lane.b32.xlu0 %v254, 60
      %v785 = vpop.permute.xlu0 %784
      %786 = vrot.lane.b32.xlu0 %v256, 60
      %v787 = vpop.permute.xlu0 %786
      %788 = vrot.lane.b32.xlu0 %v258, 60
      %v789 = vpop.permute.xlu0 %788
      %vm798 = vcmask 31744
      %v799 = vsel %vm798, %v217, %v325
      %v800 = vsel %vm798, %v219, %v327
      %v801 = vsel %vm798, %v221, %v329
      %v802 = vsel %vm798, %v223, %v331
      %v803 = vsel %vm798, %v225, %v333
      %v804 = vsel %vm798, %v227, %v335
      %v805 = vsel %vm798, %v229, %v337
      %v806 = vsel %vm798, %v231, %v339
      %vm807 = vcmask 64512
      %v808 = vsel %vm807, %v799, %v374
      %v809 = vsel %vm807, %v800, %v376
      %v810 = vsel %vm807, %v801, %v378
      %v811 = vsel %vm807, %v802, %v380
      %v812 = vsel %vm807, %v803, %v382
      %v813 = vsel %vm807, %v804, %v384
      %v814 = vsel %vm807, %v805, %v386
      %v815 = vsel %vm807, %v806, %v388
      %vm816 = vcmask 97280
      %v817 = vsel %vm816, %v808, %v399
      %v818 = vsel %vm816, %v809, %v401
      %v819 = vsel %vm816, %v810, %v403
      %v820 = vsel %vm816, %v811, %v405
      %v821 = vsel %vm816, %v812, %v407
      %v822 = vsel %vm816, %v813, %v409
      %v823 = vsel %vm816, %v814, %v411
      %v824 = vsel %vm816, %v815, %v413
      %vm825 = vcmask 130048
      %v826 = vsel %vm825, %v817, %v427
      %v827 = vsel %vm825, %v818, %v429
      %v828 = vsel %vm825, %v819, %v431
      %v829 = vsel %vm825, %v820, %v433
      %v830 = vsel %vm825, %v821, %v435
      %v831 = vsel %vm825, %v822, %v437
      %v832 = vsel %vm825, %v823, %v439
      %v833 = vsel %vm825, %v824, %v441
      %vm834 = vcmask 162816
      %v835 = vsel %vm834, %v826, %v454
      %v836 = vsel %vm834, %v827, %v456
      %v837 = vsel %vm834, %v828, %v458
      %v838 = vsel %vm834, %v829, %v460
      %v839 = vsel %vm834, %v830, %v462
      %v840 = vsel %vm834, %v831, %v464
      %v841 = vsel %vm834, %v832, %v466
      %v842 = vsel %vm834, %v833, %v468
      %vm843 = vcmask 195584
      %v844 = vsel %vm843, %v835, %v479
      %v845 = vsel %vm843, %v836, %v481
      %v846 = vsel %vm843, %v837, %v483
      %v847 = vsel %vm843, %v838, %v485
      %v848 = vsel %vm843, %v839, %v487
      %v849 = vsel %vm843, %v840, %v489
      %v850 = vsel %vm843, %v841, %v491
      %v851 = vsel %vm843, %v842, %v493
      %vm852 = vcmask 228352
      %v853 = vsel %vm852, %v844, %v507
      %v854 = vsel %vm852, %v845, %v509
      %v855 = vsel %vm852, %v846, %v511
      %v856 = vsel %vm852, %v847, %v513
      %v857 = vsel %vm852, %v848, %v515
      %v858 = vsel %vm852, %v849, %v517
      %v859 = vsel %vm852, %v850, %v519
      %v860 = vsel %vm852, %v851, %v521
      %vm861 = vcmask 261120
      %v862 = vsel %vm861, %v853, %v534
      %v863 = vsel %vm861, %v854, %v536
      %v864 = vsel %vm861, %v855, %v538
      %v865 = vsel %vm861, %v856, %v540
      %v866 = vsel %vm861, %v857, %v542
      %v867 = vsel %vm861, %v858, %v544
      %v868 = vsel %vm861, %v859, %v546
      %v869 = vsel %vm861, %v860, %v548
      %vm870 = vcmask 293888
      %v871 = vsel %vm870, %v862, %v566
      %v872 = vsel %vm870, %v863, %v568
      %v873 = vsel %vm870, %v864, %v570
      %v874 = vsel %vm870, %v865, %v572
      %v875 = vsel %vm870, %v866, %v574
      %v876 = vsel %vm870, %v867, %v576
      %v877 = vsel %vm870, %v868, %v578
      %v878 = vsel %vm870, %v869, %v580
      %vm879 = vcmask 326656
      %v880 = vsel %vm879, %v871, %v622
      %v881 = vsel %vm879, %v872, %v624
      %v882 = vsel %vm879, %v873, %v626
      %v883 = vsel %vm879, %v874, %v628
      %v884 = vsel %vm879, %v875, %v630
      %v885 = vsel %vm879, %v876, %v632
      %v886 = vsel %vm879, %v877, %v634
      %v887 = vsel %vm879, %v878, %v636
      %vm888 = vcmask 359424
      %v889 = vsel %vm888, %v880, %v670
      %v890 = vsel %vm888, %v881, %v672
      %v891 = vsel %vm888, %v882, %v674
      %v892 = vsel %vm888, %v883, %v676
      %v893 = vsel %vm888, %v884, %v678
      %v894 = vsel %vm888, %v885, %v680
      %v895 = vsel %vm888, %v886, %v682
      %v896 = vsel %vm888, %v887, %v684
      %vm897 = vcmask 392192
      %v898 = vsel %vm897, %v889, %v695
      %v899 = vsel %vm897, %v890, %v697
      %v900 = vsel %vm897, %v891, %v699
      %v901 = vsel %vm897, %v892, %v701
      %v902 = vsel %vm897, %v893, %v703
      %v903 = vsel %vm897, %v894, %v705
      %v904 = vsel %vm897, %v895, %v707
      %v905 = vsel %vm897, %v896, %v709
      %vm906 = vcmask 424960
      %v907 = vsel %vm906, %v898, %v723
      %v908 = vsel %vm906, %v899, %v725
      %v909 = vsel %vm906, %v900, %v727
      %v910 = vsel %vm906, %v901, %v729
      %v911 = vsel %vm906, %v902, %v731
      %v912 = vsel %vm906, %v903, %v733
      %v913 = vsel %vm906, %v904, %v735
      %v914 = vsel %vm906, %v905, %v737
      %vm915 = vcmask 457728
      %v916 = vsel %vm915, %v907, %v750
      %v917 = vsel %vm915, %v908, %v752
      %v918 = vsel %vm915, %v909, %v754
      %v919 = vsel %vm915, %v910, %v756
      %v920 = vsel %vm915, %v911, %v758
      %v921 = vsel %vm915, %v912, %v760
      %v922 = vsel %vm915, %v913, %v762
      %v923 = vsel %vm915, %v914, %v764
      %vm924 = vcmask 490496
      %v925 = vsel %vm924, %v916, %v775
      %v926 = vsel %vm924, %v917, %v777
      %v927 = vsel %vm924, %v918, %v779
      %v928 = vsel %vm924, %v919, %v781
      %v929 = vsel %vm924, %v920, %v783
      %v930 = vsel %vm924, %v921, %v785
      %v931 = vsel %vm924, %v922, %v787
      %v932 = vsel %vm924, %v923, %v789
      %v934 = vrot.slane %v258, 1
      %v935 = vrot.slane %v259, 1
      %v936 = vsel %vm299, %v934, %v935
      %937 = vrot.lane.b32.xlu0 %v605, 4
      %v938 = vpop.permute.xlu0 %937
      %939 = vrot.lane.b32.xlu0 %v604, 4
      %v940 = vpop.permute.xlu0 %939
      %941 = vrot.lane.b32.xlu0 %v608, 4
      %v942 = vpop.permute.xlu0 %941
      %943 = vrot.lane.b32.xlu0 %v607, 4
      %v944 = vpop.permute.xlu0 %943
      %945 = vrot.lane.b32.xlu0 %v611, 4
      %v946 = vpop.permute.xlu0 %945
      %947 = vrot.lane.b32.xlu0 %v610, 4
      %v948 = vpop.permute.xlu0 %947
      %949 = vrot.lane.b32.xlu0 %v614, 4
      %v950 = vpop.permute.xlu0 %949
      %951 = vrot.lane.b32.xlu0 %v613, 4
      %v952 = vpop.permute.xlu0 %951
      %953 = vrot.lane.b32.xlu0 %v617, 4
      %v954 = vpop.permute.xlu0 %953
      %955 = vrot.lane.b32.xlu0 %v616, 4
      %v956 = vpop.permute.xlu0 %955
      %957 = vrot.lane.b32.xlu0 %v620, 4
      %v958 = vpop.permute.xlu0 %957
      %959 = vrot.lane.b32.xlu0 %v619, 4
      %v960 = vpop.permute.xlu0 %959
      %961 = vrot.lane.b32.xlu0 %v721, 4
      %v962 = vpop.permute.xlu0 %961
      %963 = vrot.lane.b32.xlu0 %v720, 4
      %v964 = vpop.permute.xlu0 %963
      %965 = vrot.lane.b32.xlu0 %v936, 4
      %v966 = vpop.permute.xlu0 %965
      %967 = vrot.lane.b32.xlu0 %v935, 4
      %v968 = vpop.permute.xlu0 %967
      %v993 = vrot.slane %v263, 7
      %v994 = vrot.slane %v265, 7
      %v995 = vrot.slane %v267, 7
      %v996 = vrot.slane %v269, 7
      %v997 = vrot.slane %v271, 7
      %v998 = vrot.slane %v273, 7
      %v999 = vrot.slane %v275, 7
      %v1000 = vrot.slane %v277, 7
      %1001 = vrot.lane.b32.xlu0 %v993, 8
      %v1002 = vpop.permute.xlu0 %1001
      %1003 = vrot.lane.b32.xlu0 %v994, 8
      %v1004 = vpop.permute.xlu0 %1003
      %1005 = vrot.lane.b32.xlu0 %v995, 8
      %v1006 = vpop.permute.xlu0 %1005
      %1007 = vrot.lane.b32.xlu0 %v996, 8
      %v1008 = vpop.permute.xlu0 %1007
      %1009 = vrot.lane.b32.xlu0 %v997, 8
      %v1010 = vpop.permute.xlu0 %1009
      %1011 = vrot.lane.b32.xlu0 %v998, 8
      %v1012 = vpop.permute.xlu0 %1011
      %1013 = vrot.lane.b32.xlu0 %v999, 8
      %v1014 = vpop.permute.xlu0 %1013
      %1015 = vrot.lane.b32.xlu0 %v1000, 8
      %v1016 = vpop.permute.xlu0 %1015
      %1033 = vrot.lane.b32.xlu0 %v263, 12
      %v1034 = vpop.permute.xlu0 %1033
      %1035 = vrot.lane.b32.xlu0 %v264, 12
      %v1036 = vpop.permute.xlu0 %1035
      %1037 = vrot.lane.b32.xlu0 %v265, 12
      %v1038 = vpop.permute.xlu0 %1037
      %1039 = vrot.lane.b32.xlu0 %v266, 12
      %v1040 = vpop.permute.xlu0 %1039
      %1041 = vrot.lane.b32.xlu0 %v267, 12
      %v1042 = vpop.permute.xlu0 %1041
      %1043 = vrot.lane.b32.xlu0 %v268, 12
      %v1044 = vpop.permute.xlu0 %1043
      %1045 = vrot.lane.b32.xlu0 %v269, 12
      %v1046 = vpop.permute.xlu0 %1045
      %1047 = vrot.lane.b32.xlu0 %v270, 12
      %v1048 = vpop.permute.xlu0 %1047
      %1049 = vrot.lane.b32.xlu0 %v271, 12
      %v1050 = vpop.permute.xlu0 %1049
      %1051 = vrot.lane.b32.xlu0 %v272, 12
      %v1052 = vpop.permute.xlu0 %1051
      %1053 = vrot.lane.b32.xlu0 %v273, 12
      %v1054 = vpop.permute.xlu0 %1053
      %1055 = vrot.lane.b32.xlu0 %v274, 12
      %v1056 = vpop.permute.xlu0 %1055
      %1057 = vrot.lane.b32.xlu0 %v275, 12
      %v1058 = vpop.permute.xlu0 %1057
      %1059 = vrot.lane.b32.xlu0 %v276, 12
      %v1060 = vpop.permute.xlu0 %1059
      %1061 = vrot.lane.b32.xlu0 %v277, 12
      %v1062 = vpop.permute.xlu0 %1061
      %1063 = vrot.lane.b32.xlu0 %v278, 12
      %v1064 = vpop.permute.xlu0 %1063
      %v1081 = vrot.slane %v263, 1
      %v1082 = vrot.slane %v264, 1
      %v1083 = vsel %vm299, %v1081, %v1082
      %v1084 = vrot.slane %v265, 1
      %v1085 = vrot.slane %v266, 1
      %v1086 = vsel %vm299, %v1084, %v1085
      %v1087 = vrot.slane %v267, 1
      %v1088 = vrot.slane %v268, 1
      %v1089 = vsel %vm299, %v1087, %v1088
      %v1090 = vrot.slane %v269, 1
      %v1091 = vrot.slane %v270, 1
      %v1092 = vsel %vm299, %v1090, %v1091
      %v1093 = vrot.slane %v271, 1
      %v1094 = vrot.slane %v272, 1
      %v1095 = vsel %vm299, %v1093, %v1094
      %v1096 = vrot.slane %v273, 1
      %v1097 = vrot.slane %v274, 1
      %v1098 = vsel %vm299, %v1096, %v1097
      %v1099 = vrot.slane %v275, 1
      %v1100 = vrot.slane %v276, 1
      %v1101 = vsel %vm299, %v1099, %v1100
      %v1102 = vrot.slane %v277, 1
      %v1103 = vrot.slane %v278, 1
      %v1104 = vsel %vm299, %v1102, %v1103
      %1105 = vrot.lane.b32.xlu0 %v1083, 16
      %v1106 = vpop.permute.xlu0 %1105
      %1107 = vrot.lane.b32.xlu0 %v1082, 16
      %v1108 = vpop.permute.xlu0 %1107
      %1109 = vrot.lane.b32.xlu0 %v1086, 16
      %v1110 = vpop.permute.xlu0 %1109
      %1111 = vrot.lane.b32.xlu0 %v1085, 16
      %v1112 = vpop.permute.xlu0 %1111
      %1113 = vrot.lane.b32.xlu0 %v1089, 16
      %v1114 = vpop.permute.xlu0 %1113
      %1115 = vrot.lane.b32.xlu0 %v1088, 16
      %v1116 = vpop.permute.xlu0 %1115
      %1117 = vrot.lane.b32.xlu0 %v1092, 16
      %v1118 = vpop.permute.xlu0 %1117
      %1119 = vrot.lane.b32.xlu0 %v1091, 16
      %v1120 = vpop.permute.xlu0 %1119
      %1121 = vrot.lane.b32.xlu0 %v1095, 16
      %v1122 = vpop.permute.xlu0 %1121
      %1123 = vrot.lane.b32.xlu0 %v1094, 16
      %v1124 = vpop.permute.xlu0 %1123
      %1125 = vrot.lane.b32.xlu0 %v1098, 16
      %v1126 = vpop.permute.xlu0 %1125
      %1127 = vrot.lane.b32.xlu0 %v1097, 16
      %v1128 = vpop.permute.xlu0 %1127
      %1129 = vrot.lane.b32.xlu0 %v1101, 16
      %v1130 = vpop.permute.xlu0 %1129
      %1131 = vrot.lane.b32.xlu0 %v1100, 16
      %v1132 = vpop.permute.xlu0 %1131
      %1133 = vrot.lane.b32.xlu0 %v1104, 16
      %v1134 = vpop.permute.xlu0 %1133
      %1135 = vrot.lane.b32.xlu0 %v1103, 16
      %v1136 = vpop.permute.xlu0 %1135
      %v1154 = vrot.slane %v279, 7
      %1155 = vrot.lane.b32.xlu0 %v994, 20
      %v1156 = vpop.permute.xlu0 %1155
      %1157 = vrot.lane.b32.xlu0 %v995, 20
      %v1158 = vpop.permute.xlu0 %1157
      %1159 = vrot.lane.b32.xlu0 %v996, 20
      %v1160 = vpop.permute.xlu0 %1159
      %1161 = vrot.lane.b32.xlu0 %v997, 20
      %v1162 = vpop.permute.xlu0 %1161
      %1163 = vrot.lane.b32.xlu0 %v998, 20
      %v1164 = vpop.permute.xlu0 %1163
      %1165 = vrot.lane.b32.xlu0 %v999, 20
      %v1166 = vpop.permute.xlu0 %1165
      %1167 = vrot.lane.b32.xlu0 %v1000, 20
      %v1168 = vpop.permute.xlu0 %1167
      %1169 = vrot.lane.b32.xlu0 %v1154, 20
      %v1170 = vpop.permute.xlu0 %1169
      %1180 = vrot.lane.b32.xlu0 %v265, 24
      %v1181 = vpop.permute.xlu0 %1180
      %1182 = vrot.lane.b32.xlu0 %v266, 24
      %v1183 = vpop.permute.xlu0 %1182
      %1184 = vrot.lane.b32.xlu0 %v267, 24
      %v1185 = vpop.permute.xlu0 %1184
      %1186 = vrot.lane.b32.xlu0 %v268, 24
      %v1187 = vpop.permute.xlu0 %1186
      %1188 = vrot.lane.b32.xlu0 %v269, 24
      %v1189 = vpop.permute.xlu0 %1188
      %1190 = vrot.lane.b32.xlu0 %v270, 24
      %v1191 = vpop.permute.xlu0 %1190
      %1192 = vrot.lane.b32.xlu0 %v271, 24
      %v1193 = vpop.permute.xlu0 %1192
      %1194 = vrot.lane.b32.xlu0 %v272, 24
      %v1195 = vpop.permute.xlu0 %1194
      %1196 = vrot.lane.b32.xlu0 %v273, 24
      %v1197 = vpop.permute.xlu0 %1196
      %1198 = vrot.lane.b32.xlu0 %v274, 24
      %v1199 = vpop.permute.xlu0 %1198
      %1200 = vrot.lane.b32.xlu0 %v275, 24
      %v1201 = vpop.permute.xlu0 %1200
      %1202 = vrot.lane.b32.xlu0 %v276, 24
      %v1203 = vpop.permute.xlu0 %1202
      %1204 = vrot.lane.b32.xlu0 %v277, 24
      %v1205 = vpop.permute.xlu0 %1204
      %1206 = vrot.lane.b32.xlu0 %v278, 24
      %v1207 = vpop.permute.xlu0 %1206
      %1208 = vrot.lane.b32.xlu0 %v279, 24
      %v1209 = vpop.permute.xlu0 %1208
      %1210 = vrot.lane.b32.xlu0 %v280, 24
      %v1211 = vpop.permute.xlu0 %1210
      %v1228 = vrot.slane %v279, 1
      %v1229 = vrot.slane %v280, 1
      %v1230 = vsel %vm299, %v1228, %v1229
      %1231 = vrot.lane.b32.xlu0 %v1086, 28
      %v1232 = vpop.permute.xlu0 %1231
      %1233 = vrot.lane.b32.xlu0 %v1085, 28
      %v1234 = vpop.permute.xlu0 %1233
      %1235 = vrot.lane.b32.xlu0 %v1089, 28
      %v1236 = vpop.permute.xlu0 %1235
      %1237 = vrot.lane.b32.xlu0 %v1088, 28
      %v1238 = vpop.permute.xlu0 %1237
      %1239 = vrot.lane.b32.xlu0 %v1092, 28
      %v1240 = vpop.permute.xlu0 %1239
      %1241 = vrot.lane.b32.xlu0 %v1091, 28
      %v1242 = vpop.permute.xlu0 %1241
      %1243 = vrot.lane.b32.xlu0 %v1095, 28
      %v1244 = vpop.permute.xlu0 %1243
      %1245 = vrot.lane.b32.xlu0 %v1094, 28
      %v1246 = vpop.permute.xlu0 %1245
      %1247 = vrot.lane.b32.xlu0 %v1098, 28
      %v1248 = vpop.permute.xlu0 %1247
      %1249 = vrot.lane.b32.xlu0 %v1097, 28
      %v1250 = vpop.permute.xlu0 %1249
      %1251 = vrot.lane.b32.xlu0 %v1101, 28
      %v1252 = vpop.permute.xlu0 %1251
      %1253 = vrot.lane.b32.xlu0 %v1100, 28
      %v1254 = vpop.permute.xlu0 %1253
      %1255 = vrot.lane.b32.xlu0 %v1104, 28
      %v1256 = vpop.permute.xlu0 %1255
      %1257 = vrot.lane.b32.xlu0 %v1103, 28
      %v1258 = vpop.permute.xlu0 %1257
      %1259 = vrot.lane.b32.xlu0 %v1230, 28
      %v1260 = vpop.permute.xlu0 %1259
      %1261 = vrot.lane.b32.xlu0 %v1229, 28
      %v1262 = vpop.permute.xlu0 %1261
      %v1280 = vrot.slane %v281, 7
      %1281 = vrot.lane.b32.xlu0 %v995, 32
      %v1282 = vpop.permute.xlu0 %1281
      %1283 = vrot.lane.b32.xlu0 %v996, 32
      %v1284 = vpop.permute.xlu0 %1283
      %1285 = vrot.lane.b32.xlu0 %v997, 32
      %v1286 = vpop.permute.xlu0 %1285
      %1287 = vrot.lane.b32.xlu0 %v998, 32
      %v1288 = vpop.permute.xlu0 %1287
      %1289 = vrot.lane.b32.xlu0 %v999, 32
      %v1290 = vpop.permute.xlu0 %1289
      %1291 = vrot.lane.b32.xlu0 %v1000, 32
      %v1292 = vpop.permute.xlu0 %1291
      %1293 = vrot.lane.b32.xlu0 %v1154, 32
      %v1294 = vpop.permute.xlu0 %1293
      %1295 = vrot.lane.b32.xlu0 %v1280, 32
      %v1296 = vpop.permute.xlu0 %1295
      %1306 = vrot.lane.b32.xlu0 %v267, 36
      %v1307 = vpop.permute.xlu0 %1306
      %1308 = vrot.lane.b32.xlu0 %v268, 36
      %v1309 = vpop.permute.xlu0 %1308
      %1310 = vrot.lane.b32.xlu0 %v269, 36
      %v1311 = vpop.permute.xlu0 %1310
      %1312 = vrot.lane.b32.xlu0 %v270, 36
      %v1313 = vpop.permute.xlu0 %1312
      %1314 = vrot.lane.b32.xlu0 %v271, 36
      %v1315 = vpop.permute.xlu0 %1314
      %1316 = vrot.lane.b32.xlu0 %v272, 36
      %v1317 = vpop.permute.xlu0 %1316
      %1318 = vrot.lane.b32.xlu0 %v273, 36
      %v1319 = vpop.permute.xlu0 %1318
      %1320 = vrot.lane.b32.xlu0 %v274, 36
      %v1321 = vpop.permute.xlu0 %1320
      %1322 = vrot.lane.b32.xlu0 %v275, 36
      %v1323 = vpop.permute.xlu0 %1322
      %1324 = vrot.lane.b32.xlu0 %v276, 36
      %v1325 = vpop.permute.xlu0 %1324
      %1326 = vrot.lane.b32.xlu0 %v277, 36
      %v1327 = vpop.permute.xlu0 %1326
      %1328 = vrot.lane.b32.xlu0 %v278, 36
      %v1329 = vpop.permute.xlu0 %1328
      %1330 = vrot.lane.b32.xlu0 %v279, 36
      %v1331 = vpop.permute.xlu0 %1330
      %1332 = vrot.lane.b32.xlu0 %v280, 36
      %v1333 = vpop.permute.xlu0 %1332
      %1334 = vrot.lane.b32.xlu0 %v281, 36
      %v1335 = vpop.permute.xlu0 %1334
      %1336 = vrot.lane.b32.xlu0 %v282, 36
      %v1337 = vpop.permute.xlu0 %1336
      %v1354 = vrot.slane %v281, 1
      %v1355 = vrot.slane %v282, 1
      %v1356 = vsel %vm299, %v1354, %v1355
      %1357 = vrot.lane.b32.xlu0 %v1089, 40
      %v1358 = vpop.permute.xlu0 %1357
      %1359 = vrot.lane.b32.xlu0 %v1088, 40
      %v1360 = vpop.permute.xlu0 %1359
      %1361 = vrot.lane.b32.xlu0 %v1092, 40
      %v1362 = vpop.permute.xlu0 %1361
      %1363 = vrot.lane.b32.xlu0 %v1091, 40
      %v1364 = vpop.permute.xlu0 %1363
      %1365 = vrot.lane.b32.xlu0 %v1095, 40
      %v1366 = vpop.permute.xlu0 %1365
      %1367 = vrot.lane.b32.xlu0 %v1094, 40
      %v1368 = vpop.permute.xlu0 %1367
      %1369 = vrot.lane.b32.xlu0 %v1098, 40
      %v1370 = vpop.permute.xlu0 %1369
      %1371 = vrot.lane.b32.xlu0 %v1097, 40
      %v1372 = vpop.permute.xlu0 %1371
      %1373 = vrot.lane.b32.xlu0 %v1101, 40
      %v1374 = vpop.permute.xlu0 %1373
      %1375 = vrot.lane.b32.xlu0 %v1100, 40
      %v1376 = vpop.permute.xlu0 %1375
      %1377 = vrot.lane.b32.xlu0 %v1104, 40
      %v1378 = vpop.permute.xlu0 %1377
      %1379 = vrot.lane.b32.xlu0 %v1103, 40
      %v1380 = vpop.permute.xlu0 %1379
      %1381 = vrot.lane.b32.xlu0 %v1230, 40
      %v1382 = vpop.permute.xlu0 %1381
      %1383 = vrot.lane.b32.xlu0 %v1229, 40
      %v1384 = vpop.permute.xlu0 %1383
      %1385 = vrot.lane.b32.xlu0 %v1356, 40
      %v1386 = vpop.permute.xlu0 %1385
      %1387 = vrot.lane.b32.xlu0 %v1355, 40
      %v1388 = vpop.permute.xlu0 %1387
      %v1405 = vsel %vm798, %v244, %v938
      %v1406 = vsel %vm798, %v245, %v940
      %v1407 = vsel %vm798, %v246, %v942
      %v1408 = vsel %vm798, %v247, %v944
      %v1409 = vsel %vm798, %v248, %v946
      %v1410 = vsel %vm798, %v249, %v948
      %v1411 = vsel %vm798, %v250, %v950
      %v1412 = vsel %vm798, %v251, %v952
      %v1413 = vsel %vm798, %v252, %v954
      %v1414 = vsel %vm798, %v253, %v956
      %v1415 = vsel %vm798, %v254, %v958
      %v1416 = vsel %vm798, %v255, %v960
      %v1417 = vsel %vm798, %v256, %v962
      %v1418 = vsel %vm798, %v257, %v964
      %v1419 = vsel %vm798, %v258, %v966
      %v1420 = vsel %vm798, %v259, %v968
      %v1421 = vsel %vm807, %v1405, %v1002
      %v1422 = vsel %vm807, %v1406, %v1002
      %v1423 = vsel %vm807, %v1407, %v1004
      %v1424 = vsel %vm807, %v1408, %v1004
      %v1425 = vsel %vm807, %v1409, %v1006
      %v1426 = vsel %vm807, %v1410, %v1006
      %v1427 = vsel %vm807, %v1411, %v1008
      %v1428 = vsel %vm807, %v1412, %v1008
      %v1429 = vsel %vm807, %v1413, %v1010
      %v1430 = vsel %vm807, %v1414, %v1010
      %v1431 = vsel %vm807, %v1415, %v1012
      %v1432 = vsel %vm807, %v1416, %v1012
      %v1433 = vsel %vm807, %v1417, %v1014
      %v1434 = vsel %vm807, %v1418, %v1014
      %v1435 = vsel %vm807, %v1419, %v1016
      %v1436 = vsel %vm807, %v1420, %v1016
      %v1437 = vsel %vm816, %v1421, %v1034
      %v1438 = vsel %vm816, %v1422, %v1036
      %v1439 = vsel %vm816, %v1423, %v1038
      %v1440 = vsel %vm816, %v1424, %v1040
      %v1441 = vsel %vm816, %v1425, %v1042
      %v1442 = vsel %vm816, %v1426, %v1044
      %v1443 = vsel %vm816, %v1427, %v1046
      %v1444 = vsel %vm816, %v1428, %v1048
      %v1445 = vsel %vm816, %v1429, %v1050
      %v1446 = vsel %vm816, %v1430, %v1052
      %v1447 = vsel %vm816, %v1431, %v1054
      %v1448 = vsel %vm816, %v1432, %v1056
      %v1449 = vsel %vm816, %v1433, %v1058
      %v1450 = vsel %vm816, %v1434, %v1060
      %v1451 = vsel %vm816, %v1435, %v1062
      %v1452 = vsel %vm816, %v1436, %v1064
      %v1453 = vsel %vm825, %v1437, %v1106
      %v1454 = vsel %vm825, %v1438, %v1108
      %v1455 = vsel %vm825, %v1439, %v1110
      %v1456 = vsel %vm825, %v1440, %v1112
      %v1457 = vsel %vm825, %v1441, %v1114
      %v1458 = vsel %vm825, %v1442, %v1116
      %v1459 = vsel %vm825, %v1443, %v1118
      %v1460 = vsel %vm825, %v1444, %v1120
      %v1461 = vsel %vm825, %v1445, %v1122
      %v1462 = vsel %vm825, %v1446, %v1124
      %v1463 = vsel %vm825, %v1447, %v1126
      %v1464 = vsel %vm825, %v1448, %v1128
      %v1465 = vsel %vm825, %v1449, %v1130
      %v1466 = vsel %vm825, %v1450, %v1132
      %v1467 = vsel %vm825, %v1451, %v1134
      %v1468 = vsel %vm825, %v1452, %v1136
      %v1469 = vsel %vm834, %v1453, %v1156
      %v1470 = vsel %vm834, %v1454, %v1156
      %v1471 = vsel %vm834, %v1455, %v1158
      %v1472 = vsel %vm834, %v1456, %v1158
      %v1473 = vsel %vm834, %v1457, %v1160
      %v1474 = vsel %vm834, %v1458, %v1160
      %v1475 = vsel %vm834, %v1459, %v1162
      %v1476 = vsel %vm834, %v1460, %v1162
      %v1477 = vsel %vm834, %v1461, %v1164
      %v1478 = vsel %vm834, %v1462, %v1164
      %v1479 = vsel %vm834, %v1463, %v1166
      %v1480 = vsel %vm834, %v1464, %v1166
      %v1481 = vsel %vm834, %v1465, %v1168
      %v1482 = vsel %vm834, %v1466, %v1168
      %v1483 = vsel %vm834, %v1467, %v1170
      %v1484 = vsel %vm834, %v1468, %v1170
      %v1485 = vsel %vm843, %v1469, %v1181
      %v1486 = vsel %vm843, %v1470, %v1183
      %v1487 = vsel %vm843, %v1471, %v1185
      %v1488 = vsel %vm843, %v1472, %v1187
      %v1489 = vsel %vm843, %v1473, %v1189
      %v1490 = vsel %vm843, %v1474, %v1191
      %v1491 = vsel %vm843, %v1475, %v1193
      %v1492 = vsel %vm843, %v1476, %v1195
      %v1493 = vsel %vm843, %v1477, %v1197
      %v1494 = vsel %vm843, %v1478, %v1199
      %v1495 = vsel %vm843, %v1479, %v1201
      %v1496 = vsel %vm843, %v1480, %v1203
      %v1497 = vsel %vm843, %v1481, %v1205
      %v1498 = vsel %vm843, %v1482, %v1207
      %v1499 = vsel %vm843, %v1483, %v1209
      %v1500 = vsel %vm843, %v1484, %v1211
      %v1501 = vsel %vm852, %v1485, %v1232
      %v1502 = vsel %vm852, %v1486, %v1234
      %v1503 = vsel %vm852, %v1487, %v1236
      %v1504 = vsel %vm852, %v1488, %v1238
      %v1505 = vsel %vm852, %v1489, %v1240
      %v1506 = vsel %vm852, %v1490, %v1242
      %v1507 = vsel %vm852, %v1491, %v1244
      %v1508 = vsel %vm852, %v1492, %v1246
      %v1509 = vsel %vm852, %v1493, %v1248
      %v1510 = vsel %vm852, %v1494, %v1250
      %v1511 = vsel %vm852, %v1495, %v1252
      %v1512 = vsel %vm852, %v1496, %v1254
      %v1513 = vsel %vm852, %v1497, %v1256
      %v1514 = vsel %vm852, %v1498, %v1258
      %v1515 = vsel %vm852, %v1499, %v1260
      %v1516 = vsel %vm852, %v1500, %v1262
      %v1517 = vsel %vm861, %v1501, %v1282
      %v1518 = vsel %vm861, %v1502, %v1282
      %v1519 = vsel %vm861, %v1503, %v1284
      %v1520 = vsel %vm861, %v1504, %v1284
      %v1521 = vsel %vm861, %v1505, %v1286
      %v1522 = vsel %vm861, %v1506, %v1286
      %v1523 = vsel %vm861, %v1507, %v1288
      %v1524 = vsel %vm861, %v1508, %v1288
      %v1525 = vsel %vm861, %v1509, %v1290
      %v1526 = vsel %vm861, %v1510, %v1290
      %v1527 = vsel %vm861, %v1511, %v1292
      %v1528 = vsel %vm861, %v1512, %v1292
      %v1529 = vsel %vm861, %v1513, %v1294
      %v1530 = vsel %vm861, %v1514, %v1294
      %v1531 = vsel %vm861, %v1515, %v1296
      %v1532 = vsel %vm861, %v1516, %v1296
      %v1533 = vsel %vm870, %v1517, %v1307
      %v1534 = vsel %vm870, %v1518, %v1309
      %v1535 = vsel %vm870, %v1519, %v1311
      %v1536 = vsel %vm870, %v1520, %v1313
      %v1537 = vsel %vm870, %v1521, %v1315
      %v1538 = vsel %vm870, %v1522, %v1317
      %v1539 = vsel %vm870, %v1523, %v1319
      %v1540 = vsel %vm870, %v1524, %v1321
      %v1541 = vsel %vm870, %v1525, %v1323
      %v1542 = vsel %vm870, %v1526, %v1325
      %v1543 = vsel %vm870, %v1527, %v1327
      %v1544 = vsel %vm870, %v1528, %v1329
      %v1545 = vsel %vm870, %v1529, %v1331
      %v1546 = vsel %vm870, %v1530, %v1333
      %v1547 = vsel %vm870, %v1531, %v1335
      %v1548 = vsel %vm870, %v1532, %v1337
      %v1549 = vsel %vm879, %v1533, %v1358
      %v1550 = vsel %vm879, %v1534, %v1360
      %v1551 = vsel %vm879, %v1535, %v1362
      %v1552 = vsel %vm879, %v1536, %v1364
      %v1553 = vsel %vm879, %v1537, %v1366
      %v1554 = vsel %vm879, %v1538, %v1368
      %v1555 = vsel %vm879, %v1539, %v1370
      %v1556 = vsel %vm879, %v1540, %v1372
      %v1557 = vsel %vm879, %v1541, %v1374
      %v1558 = vsel %vm879, %v1542, %v1376
      %v1559 = vsel %vm879, %v1543, %v1378
      %v1560 = vsel %vm879, %v1544, %v1380
      %v1561 = vsel %vm879, %v1545, %v1382
      %v1562 = vsel %vm879, %v1546, %v1384
      %v1563 = vsel %vm879, %v1547, %v1386
      %v1564 = vsel %vm879, %v1548, %v1388
      %v1565 = vsel %vm888, %v1549, 0.0
      %v1566 = vsel %vm888, %v1550, 0.0
      %v1567 = vsel %vm888, %v1551, 0.0
      %v1568 = vsel %vm888, %v1552, 0.0
      %v1569 = vsel %vm888, %v1553, 0.0
      %v1570 = vsel %vm888, %v1554, 0.0
      %v1571 = vsel %vm888, %v1555, 0.0
      %v1572 = vsel %vm888, %v1556, 0.0
      %v1573 = vsel %vm888, %v1557, 0.0
      %v1574 = vsel %vm888, %v1558, 0.0
      %v1575 = vsel %vm888, %v1559, 0.0
      %v1576 = vsel %vm888, %v1560, 0.0
      %v1577 = vsel %vm888, %v1561, 0.0
      %v1578 = vsel %vm888, %v1562, 0.0
      %v1579 = vsel %vm888, %v1563, 0.0
      %v1580 = vsel %vm888, %v1564, 0.0
      %v1597 = vrot.slane %v1565, 1
      %v1598 = vrot.slane %v1566, 1
      %v1599 = vsel %vm299, %v1597, %v1598
      %v1600 = vrot.slane %v1567, 1
      %v1601 = vrot.slane %v1568, 1
      %v1602 = vsel %vm299, %v1600, %v1601
      %v1603 = vrot.slane %v1569, 1
      %v1604 = vrot.slane %v1570, 1
      %v1605 = vsel %vm299, %v1603, %v1604
      %v1606 = vrot.slane %v1571, 1
      %v1607 = vrot.slane %v1572, 1
      %v1608 = vsel %vm299, %v1606, %v1607
      %v1609 = vrot.slane %v1573, 1
      %v1610 = vrot.slane %v1574, 1
      %v1611 = vsel %vm299, %v1609, %v1610
      %v1612 = vrot.slane %v1575, 1
      %v1613 = vrot.slane %v1576, 1
      %v1614 = vsel %vm299, %v1612, %v1613
      %v1615 = vrot.slane %v1577, 1
      %v1616 = vrot.slane %v1578, 1
      %v1617 = vsel %vm299, %v1615, %v1616
      %v1618 = vrot.slane %v1579, 1
      %v1619 = vrot.slane %v1580, 1
      %v1620 = vsel %vm299, %v1618, %v1619
      %1621 = vrot.lane.b32.xlu0 %v1599, 64
      %v1622 = vpop.permute.xlu0 %1621
      %1623 = vrot.lane.b32.xlu0 %v1602, 64
      %v1624 = vpop.permute.xlu0 %1623
      %1625 = vrot.lane.b32.xlu0 %v1605, 64
      %v1626 = vpop.permute.xlu0 %1625
      %1627 = vrot.lane.b32.xlu0 %v1608, 64
      %v1628 = vpop.permute.xlu0 %1627
      %1629 = vrot.lane.b32.xlu0 %v1611, 64
      %v1630 = vpop.permute.xlu0 %1629
      %1631 = vrot.lane.b32.xlu0 %v1614, 64
      %v1632 = vpop.permute.xlu0 %1631
      %1633 = vrot.lane.b32.xlu0 %v1617, 64
      %v1634 = vpop.permute.xlu0 %1633
      %1635 = vrot.lane.b32.xlu0 %v1620, 64
      %v1636 = vpop.permute.xlu0 %1635
      %vm1645 = vcmask 523264
      %v1646 = vsel %vm1645, %v925, %v1622
      %v1647 = vsel %vm1645, %v926, %v1624
      %v1648 = vsel %vm1645, %v927, %v1626
      %v1649 = vsel %vm1645, %v928, %v1628
      %v1650 = vsel %vm1645, %v929, %v1630
      %v1651 = vsel %vm1645, %v930, %v1632
      %v1652 = vsel %vm1645, %v931, %v1634
      %v1653 = vsel %vm1645, %v932, %v1636
      %v1654 = vpack.c.bf16 %v1647, %v1646
      %v1655 = vpack.c.bf16 %v1649, %v1648
      %v1656 = vpack.c.bf16 %v1651, %v1650
      %v1657 = vpack.c.bf16 %v1653, %v1652
      %v1658 = vld [vmem:[%s1] sm:$0xf]
      %v1659 = vld [vmem:[%s1 + $0x4] sm:$0xf]
      %v1660 = vld [vmem:[%s1 + $0x8] sm:$0xf]
      %v1661 = vld [vmem:[%s1 + $0xc] sm:$0xf]
      %v1662 = vld [vmem:[%s1 + $0x10] sm:$0xf]
      %v1663 = vld [vmem:[%s1 + $0x14] sm:$0xf]
      %v1664 = vld [vmem:[%s1 + $0x18] sm:$0xf]
      %v1665 = vld [vmem:[%s1 + $0x1c] sm:$0xf]
      %v1666 = vld [vmem:[%s1 + $0x20] sm:$0xf]
      %v1667 = vld [vmem:[%s1 + $0x24] sm:$0xf]
      %v1668 = vld [vmem:[%s1 + $0x28] sm:$0xf]
      %v1669 = vld [vmem:[%s1 + $0x2c] sm:$0xf]
      %v1670 = vld [vmem:[%s1 + $0x30] sm:$0xf]
      %v1671 = vld [vmem:[%s1 + $0x34] sm:$0xf]
      %v1672 = vld [vmem:[%s1 + $0x38] sm:$0xf]
      %v1673 = vld [vmem:[%s1 + $0x3c] sm:$0xf]
      %v1690 = vunpack.c.l.b16 %v1658
      %v1691 = vunpack.c.l.b16 %v1659
      %v1692 = vunpack.c.l.b16 %v1660
      %v1693 = vunpack.c.l.b16 %v1661
      %v1694 = vunpack.c.l.b16 %v1662
      %v1695 = vunpack.c.l.b16 %v1663
      %v1696 = vunpack.c.l.b16 %v1664
      %v1697 = vunpack.c.l.b16 %v1665
      %v1698 = vunpack.c.l.b16 %v1666
      %v1699 = vunpack.c.l.b16 %v1667
      %v1700 = vunpack.c.l.b16 %v1668
      %v1701 = vunpack.c.l.b16 %v1669
      %v1702 = vunpack.c.l.b16 %v1670
      %v1703 = vunpack.c.l.b16 %v1671
      %v1704 = vunpack.c.l.b16 %v1672
      %v1705 = vunpack.c.l.b16 %v1673
      %v1706 = vpack.c.b16 %v1691, %v1690
      %v1707 = vpack.c.b16 %v1693, %v1692
      %v1708 = vpack.c.b16 %v1695, %v1694
      %v1709 = vpack.c.b16 %v1697, %v1696
      %v1710 = vpack.c.b16 %v1699, %v1698
      %v1711 = vpack.c.b16 %v1701, %v1700
      %v1712 = vpack.c.b16 %v1703, %v1702
      %v1713 = vpack.c.b16 %v1705, %v1704
      %1722 = vmatprep.subr.bf16.mxu0 0
      %1723 = vmatpush1.bf16.msra.mxu0 %v1713
      %1724 = vmatprep.subr.bf16.mxu0 0
      %1725 = vmatpush1.bf16.msra.mxu0 %v1712
      %1726 = vmatprep.subr.bf16.mxu0 0
      %1727 = vmatpush1.bf16.msra.mxu0 %v1711
      %1728 = vmatprep.subr.bf16.mxu0 0
      %1729 = vmatpush1.bf16.msra.mxu0 %v1710
      %1730 = vmatprep.subr.bf16.mxu0 0
      %1731 = vmatpush1.bf16.msra.mxu0 %v1709
      %1732 = vmatprep.subr.bf16.mxu0 0
      %1733 = vmatpush1.bf16.msra.mxu0 %v1708
      %1734 = vmatprep.subr.bf16.mxu0 0
      %1735 = vmatpush1.bf16.msra.mxu0 %v1707
      %1736 = vmatprep.subr.bf16.mxu0 0
      %1737 = vmatpush1.bf16.msra.mxu0 %v1706
      %1738 = vmatprep.subr.bf16.mxu0 0
      %1739 = vmatpush2.bf16.msra.mxu0 0
      %1740 = vmatprep.subr.bf16.mxu0 0
      %1741 = vmatpush2.bf16.msra.mxu0 0
      %1742 = vmatprep.subr.bf16.mxu0 0
      %1743 = vmatpush2.bf16.msra.mxu0 0
      %1744 = vmatprep.subr.bf16.mxu0 0
      %1745 = vmatpush2.bf16.msra.mxu0 0
      %1746 = vmatprep.subr.bf16.mxu0 0
      %1747 = vmatpush2.bf16.msra.mxu0 0
      %1748 = vmatprep.subr.bf16.mxu0 0
      %1749 = vmatpush2.bf16.msra.mxu0 0
      %1750 = vmatprep.subr.bf16.mxu0 0
      %1751 = vmatpush2.bf16.msra.mxu0 0
      %1752 = vmatprep.subr.bf16.mxu0 0
      %1753 = vmatpush2.bf16.msra.mxu0 0
      %1754 = vmatprep.mubr.bf16.mxu0 0
      %1755 = vmatmul.mubr.bf16.gmra.mxu0 %v1654
      %v1756 = vpop.f32.mrf.mxu0
      %v1757 = vadd.f32 0.0, %v1756
      %v1758 = vpop.f32.mrf.mxu0
      %v1759 = vpop.f32.mrf.mxu0
      %v1760 = vadd.f32 0.0, %v1759
      %v1761 = vpop.f32.mrf.mxu0
      %1762 = vmatprep.mubr.bf16.mxu0 0
      %1763 = vmatmul.mubr.bf16.gmra.mxu0 %v1655
      %v1764 = vpop.f32.mrf.mxu0
      %v1765 = vadd.f32 0.0, %v1764
      %v1766 = vpop.f32.mrf.mxu0
      %v1767 = vpop.f32.mrf.mxu0
      %v1768 = vadd.f32 0.0, %v1767
      %v1769 = vpop.f32.mrf.mxu0
      %1770 = vmatprep.mubr.bf16.mxu0 0
      %1771 = vmatmul.mubr.bf16.gmra.mxu0 %v1656
      %v1772 = vpop.f32.mrf.mxu0
      %v1773 = vadd.f32 0.0, %v1772
      %v1774 = vpop.f32.mrf.mxu0
      %v1775 = vpop.f32.mrf.mxu0
      %v1776 = vadd.f32 0.0, %v1775
      %v1777 = vpop.f32.mrf.mxu0
      %1778 = vmatprep.mubr.bf16.mxu0 0
      %1779 = vmatmul.mubr.bf16.gmra.mxu0 %v1657
      %v1780 = vpop.f32.mrf.mxu0
      %v1781 = vadd.f32 0.0, %v1780
      %v1782 = vpop.f32.mrf.mxu0
      %v1783 = vpop.f32.mrf.mxu0
      %v1784 = vadd.f32 0.0, %v1783
      %v1785 = vpop.f32.mrf.mxu0
      %1786 = vdwg.mxu0
      %v1787 = vpack.c.bf16 %v1760, %v1757
      %v1788 = vpack.c.bf16 %v1768, %v1765
      %v1789 = vpack.c.bf16 %v1776, %v1773
      %v1790 = vpack.c.bf16 %v1784, %v1781
      %v1795 = vunpack.c.l.b16 %v1787
      %v1796 = vunpack.c.h.b16 %v1787
      %v1797 = vunpack.c.l.b16 %v1788
      %v1798 = vunpack.c.h.b16 %v1788
      %v1799 = vunpack.c.l.b16 %v1789
      %v1800 = vunpack.c.h.b16 %v1789
      %v1801 = vunpack.c.l.b16 %v1790
      %v1802 = vunpack.c.h.b16 %v1790
      %v1803 = vpack.c.b16 %v1795, %v1795
      %v1804 = vpack.c.b16 %v1796, %v1796
      %v1805 = vpack.c.b16 %v1797, %v1797
      %v1806 = vpack.c.b16 %v1798, %v1798
      %v1807 = vpack.c.b16 %v1799, %v1799
      %v1808 = vpack.c.b16 %v1800, %v1800
      %v1809 = vpack.c.b16 %v1801, %v1801
      %v1810 = vpack.c.b16 %v1802, %v1802
      %1819 = vst [vmem:[%s205] sm:$0xf] %v1803
      %1820 = vst [vmem:[%s205 + $0x4] sm:$0xf] %v1804
      %1821 = vst [vmem:[%s205 + $0x8] sm:$0xf] %v1805
      %1822 = vst [vmem:[%s205 + $0xc] sm:$0xf] %v1806
      %1823 = vst [vmem:[%s205 + $0x10] sm:$0xf] %v1807
      %1824 = vst [vmem:[%s205 + $0x14] sm:$0xf] %v1808
      %1825 = vst [vmem:[%s205 + $0x18] sm:$0xf] %v1809
      %1826 = vst [vmem:[%s205 + $0x1c] sm:$0xf] %v1810
      %v1827 = vadd.f32 %v1757, %v1760
      %v1828 = vadd.f32 %v1827, %v1765
      %v1829 = vadd.f32 %v1828, %v1768
      %v1830 = vadd.f32 %v1829, %v1773
      %v1831 = vadd.f32 %v1830, %v1776
      %v1832 = vadd.f32 %v1831, %v1781
      %v1833 = vadd.f32 %v1832, %v1784
      %v1834 = vrot.slane %v1833, 4
      %v1835 = vadd.f32 %v1833, %v1834
      %v1836 = vrot.slane %v1835, 2
      %v1837 = vadd.f32 %v1835, %v1836
      %v1838 = vrot.slane %v1837, 1
      %v1839 = vadd.f32 %v1837, %v1838
      %v1840 = vmul.f32 %v1757, %v1757
      %v1841 = vmul.f32 %v1760, %v1760
      %v1842 = vmul.f32 %v1765, %v1765
      %v1843 = vmul.f32 %v1768, %v1768
      %v1844 = vmul.f32 %v1773, %v1773
      %v1845 = vmul.f32 %v1776, %v1776
      %v1846 = vmul.f32 %v1781, %v1781
      %v1847 = vmul.f32 %v1784, %v1784
      %v1848 = vadd.f32 %v1840, %v1841
      %v1849 = vadd.f32 %v1848, %v1842
      %v1850 = vadd.f32 %v1849, %v1843
      %v1851 = vadd.f32 %v1850, %v1844
      %v1852 = vadd.f32 %v1851, %v1845
      %v1853 = vadd.f32 %v1852, %v1846
      %v1854 = vadd.f32 %v1853, %v1847
      %v1855 = vrot.slane %v1854, 4
      %v1856 = vadd.f32 %v1854, %v1855
      %v1857 = vrot.slane %v1856, 2
      %v1858 = vadd.f32 %v1856, %v1857
      %v1859 = vrot.slane %v1858, 1
      %v1860 = vadd.f32 %v1858, %v1859
      %vm1861 = vcmask 1040384
      %v1862 = vsel %vm1861, %v1839, %v1860
      %1863 = vst [vmem:[%s213] sm:$0x3] %v1862
      %p1864 = scmp.lt.s32.totalorder %s20, 3
      %s1865 = scalar_select %p1864, %s20, 3
      %p1866 = scmp.lt.s32.totalorder %s19, 1
      %s1867 = scalar_select %p1866, %s19, 1
      %s1868 = smul.addr %s1867, 8
      %s1869 = smul.addr %s1865, 16
      %s1870 = sadd.s32 %s1868, %s1869
      %s1871 = smul.addr %s1870, 4
      %s1872 = scalar_lea.vmem %s2, %s1871
      %p1873 = scmp.lt.s32.totalorder %s19, 1
      %s1874 = scalar_select %p1873, %s19, 1
      %p1875 = scmp.lt.s32.totalorder %s20, 3
      %s1876 = scalar_select %p1875, %s20, 3
      %s1877 = smul.addr %s1874, 4
      %s1878 = sadd.s32 %s1876, %s1877
      %s1879 = smul.addr %s1878, 2
      %s1880 = scalar_lea.vmem %s3, %s1879
      // Predicated region
      $region29: #{conv3d_snn_forward.2} parent=27 // pred_check
        %p1881 = pneg %p94
      $region30: #{conv3d_snn_forward.2} parent=27 // pred_check_branch
        %1883 = sbr.rel (%p1881) target = $region32
      $region31: #{conv3d_snn_forward.2} parent=27 // pred_region
        _
      $region32: #{conv3d_snn_forward.2} parent=27 // pred_fallthru
        _
      // Predicated region
      $region33: #{conv3d_snn_forward.2} parent=27 // pred_check
        %p1884 = pneg %p122
      $region34: #{conv3d_snn_forward.2} parent=27 // pred_check_branch
        %1886 = sbr.rel (%p1884) target = $region36
      $region35: #{conv3d_snn_forward.2} parent=27 // pred_region
        _
      $region36: #{conv3d_snn_forward.2} parent=27 // pred_fallthru
        _
    $region28: #{conv3d_snn_forward.2} parent=5 // pred_fallthru
      _
    %p1887 = scmp.le.s32.totalorder 2, %s10
    // Predicated region
    $region37: #{conv3d_snn_forward.2} parent=5 // pred_check
      %p1888 = pneg %p1887
    $region38: #{conv3d_snn_forward.2} parent=5 // pred_check_branch
      %1890 = sbr.rel (%p1888) target = $region40
    $region39: #{conv3d_snn_forward.2} parent=5 // pred_region
      %s1891 = ssub.s32 %s10, 2
      // Predicated region
      $region41: #{conv3d_snn_forward.2} parent=39 // pred_check
        %p1892 = pneg %p100
      $region42: #{conv3d_snn_forward.2} parent=39 // pred_check_branch
        %1894 = sbr.rel (%p1892) target = $region44
      $region43: #{conv3d_snn_forward.2} parent=39 // pred_region
        %p1895 = scmp.lt.s32.totalorder %s22, 3
        %s1896 = scalar_select %p1895, %s22, 3
        %p1897 = scmp.lt.s32.totalorder %s21, 1
        %s1898 = scalar_select %p1897, %s21, 1
        %s1899 = smul.addr %s1898, 8
        %s1900 = smul.addr %s1896, 16
        %s1901 = sadd.s32 %s1899, %s1900
        %s1902 = smul.addr %s1901, 4
        %s1903 = scalar_lea.vmem %s2, %s1902
      $region44: #{conv3d_snn_forward.2} parent=39 // pred_fallthru
        _
      // Predicated region
      $region45: #{conv3d_snn_forward.2} parent=39 // pred_check
        %p1904 = pneg %p128
      $region46: #{conv3d_snn_forward.2} parent=39 // pred_check_branch
        %1906 = sbr.rel (%p1904) target = $region48
      $region47: #{conv3d_snn_forward.2} parent=39 // pred_region
        %p1907 = scmp.lt.s32.totalorder %s21, 1
        %s1908 = scalar_select %p1907, %s21, 1
        %p1909 = scmp.lt.s32.totalorder %s22, 3
        %s1910 = scalar_select %p1909, %s22, 3
        %s1911 = smul.addr %s1908, 4
        %s1912 = sadd.s32 %s1910, %s1911
        %s1913 = smul.addr %s1912, 2
        %s1914 = scalar_lea.vmem %s3, %s1913
      $region48: #{conv3d_snn_forward.2} parent=39 // pred_fallthru
        _
    $region40: #{conv3d_snn_forward.2} parent=5 // pred_fallthru
      _
  $region6: #{conv3d_snn_forward.2} parent=0 // loop_footer
    %s14 = sadd.s32 1, %s10
  $region7: #{conv3d_snn_forward.2} parent=0 // loop_footer_branch
    %9 = sbr.rel target = $region3
  $region8: #{conv3d_snn_forward.2} parent=0 // loop_exit
    _

</llo_original>
